<compile_context>
chip_gen: v6e
topology: v6e:2x2x1
jax: 0.10.0
libtpu: 0.0.40
codegen_flags: <defaults>
</compile_context>

<pallas_src>
import jax
import jax.numpy as jnp
from jax.experimental import pallas as pl
from jax.experimental.pallas import tpu as pltpu


def sentence_cls_kernel(h_ref, mask_ref, w1_ref, b1_ref, w2_ref, b2_ref,
                        out_ref, sum_acc, cnt_acc):
    """Masked-mean pooling over the sequence axis + 2-layer classifier."""
    k = pl.program_id(1)

    @pl.when(k == 0)
    def _init():
        sum_acc[...] = jnp.zeros_like(sum_acc)
        cnt_acc[...] = jnp.zeros_like(cnt_acc)

    # h tile: (tb, ts, E); mask tile: (tb, ts) lane-dense f32.
    # astype is a no-op for f32 h; explicit upcast only matters if h arrives
    # bf16 (v5e has no bf16 VPU).
    h = h_ref[...].astype(jnp.float32)
    m = mask_ref[...]
    sum_acc[...] += jnp.sum(h * m[:, :, None], axis=1)       # (tb, E)
    cnt_acc[...] += jnp.sum(m, axis=1, keepdims=True)        # (tb, 1)

    @pl.when(k == pl.num_programs(1) - 1)
    def _finalize():
        denom = jnp.maximum(cnt_acc[...], 1.0)               # all-padding guard
        pooled = sum_acc[...] / denom                        # exact divide (once per batch tile)
        z = jnp.tanh(jnp.dot(pooled, w1_ref[...],
                             preferred_element_type=jnp.float32) + b1_ref[...])
        logits = jnp.dot(z, w2_ref[...],
                         preferred_element_type=jnp.float32) + b2_ref[...]
        out_ref[...] = logits.astype(out_ref.dtype)


def _tile_candidates(full, align):
    """Tile sizes t with full % t == 0 and (t == full or t % align == 0), descending."""
    cands = {full}
    t = (full // align) * align
    while t >= align:
        if full % t == 0:
            cands.add(t)
        t -= align
    return sorted(cands, reverse=True)


def _select_tiles(B, S, E, HID, CP, h_itemsize, tile_b, tile_s):
    """VMEM-budget-driven (tb, ts) selection + vmem limit for the compiler."""
    try:
        vmem_cap = int(pltpu.get_tpu_info().vmem_capacity_bytes)
    except Exception:
        vmem_cap = 64 * 1024 * 1024          # conservative: v7x has 64 MiB per TensorCore
    budget = min(int(vmem_cap * 0.45), 64 * 1024 * 1024)
    vmem_limit = min(int(vmem_cap * 0.75), 96 * 1024 * 1024)

    # Resident weights/biases, double-buffered f32.
    fixed = 2 * 4 * (E * HID + HID + HID * CP + CP)

    def cost(tb, ts):
        h_tiles = 2 * tb * ts * E * h_itemsize          # double-buffered h
        interm = 2 * tb * ts * E * 4                    # broadcast mask + masked product (f32)
        mask_t = 2 * tb * ts * 4                        # double-buffered mask
        out_t = 2 * tb * CP * 4
        scratch = tb * E * 4 + ((tb + 7) // 8) * 8 * 128 * 4
        return h_tiles + interm + mask_t + out_t + scratch + fixed

    # ts (lane dim of the 2-D mask / sublane dim of h) must be a multiple of
    # 128 or the full S; tb must be a multiple of 8 or the full B.
    ts_cands = [tile_s] if tile_s is not None else _tile_candidates(S, 128)
    tb_cands = [tile_b] if tile_b is not None else _tile_candidates(B, 8)

    best_tiles, best_score = None, None
    for ts in ts_cands:
        for tb in tb_cands:
            if cost(tb, ts) > budget:
                continue
            # Favor a large streamed (seq) tile first (diminishing returns > 512),
            # then a large batch tile.
            score = (min(ts, 512) * tb, ts, tb)
            if best_score is None or score > best_score:
                best_score, best_tiles = score, (tb, ts)
    if best_tiles is None:
        best_tiles = (tb_cands[-1], ts_cands[-1])       # smallest legal; rely on vmem_limit
    tb, ts = best_tiles

    # Prefer an even (>=2) batch-tile count so v7x can split the "parallel"
    # axis across both TensorCores, if it costs at most a 2x smaller tb.
    if tile_b is None and (B // tb) % 2 != 0:
        for tb2 in tb_cands:
            if tb2 < tb and (B // tb2) % 2 == 0 and 2 * tb2 >= tb and cost(tb2, ts) <= budget:
                tb = tb2
                break
    return tb, ts, vmem_limit


def sentence_classification_forward(h, attention_mask, w1, b1, w2, b2,
                                    *, tile_b=None, tile_s=None):
    """classifier(masked_mean(h, mask, dim=1)).

    h: (B, S, E) embedding-model activations (f32 or bf16).
    attention_mask: (B, S) {0, 1}.
    w1: (E, 128), b1: (128,), w2: (128, C), b2: (C,)  -- torch Linear weights, transposed.
    """
    B, S, E = h.shape
    HID = w1.shape[1]
    C = w2.shape[1]

    # Lane-dense logits slab: pad classifier output dim to a multiple of 128
    # (unmasked vst); sliced back to C below.  Under jit this prep fuses /
    # constant-folds instead of being a per-call HBM round-trip.
    CP = max(128, ((C + 127) // 128) * 128)
    w1f = w1.astype(jnp.float32)
    b1f = b1.reshape(1, HID).astype(jnp.float32)
    w2p = jnp.zeros((HID, CP), jnp.float32).at[:, :C].set(w2.astype(jnp.float32))
    b2p = jnp.zeros((1, CP), jnp.float32).at[:, :C].set(
        b2.reshape(1, C).astype(jnp.float32))

    # Mask stays 2-D and lane-dense; a (B, S, 1) layout lane-pads 1 -> 128 in VMEM.
    mask2 = attention_mask.astype(jnp.float32)

    tb, ts, vmem_limit = _select_tiles(B, S, E, HID, CP, h.dtype.itemsize,
                                       tile_b, tile_s)
    if B % tb or S % ts:
        raise ValueError(f"tile sizes must divide (B, S): tb={tb}, ts={ts}, B={B}, S={S}")
    if ts != S and ts % 128:
        raise ValueError(f"tile_s must be a multiple of 128 or equal to S; got {ts}")
    if tb != B and tb % 8:
        raise ValueError(f"tile_b must be a multiple of 8 or equal to B; got {tb}")
    grid = (B // tb, S // ts)

    grid_spec = pltpu.PrefetchScalarGridSpec(
        num_scalar_prefetch=0,
        grid=grid,
        in_specs=[
            pl.BlockSpec((tb, ts, E), lambda i, k: (i, k, 0)),   # h tiles (streamed)
            pl.BlockSpec((tb, ts), lambda i, k: (i, k)),         # mask tiles (lane-dense)
            pl.BlockSpec((E, HID), lambda i, k: (0, 0)),         # W1 (VMEM-resident)
            pl.BlockSpec((1, HID), lambda i, k: (0, 0)),         # b1
            pl.BlockSpec((HID, CP), lambda i, k: (0, 0)),        # W2 (padded, resident)
            pl.BlockSpec((1, CP), lambda i, k: (0, 0)),          # b2 (padded)
        ],
        out_specs=pl.BlockSpec((tb, CP), lambda i, k: (i, 0)),   # lane-dense logits slab
        scratch_shapes=[
            pltpu.VMEM((tb, E), jnp.float32),   # masked-sum accumulator
            pltpu.VMEM((tb, 1), jnp.float32),   # token-count accumulator
        ],
    )

    logits_padded = pl.pallas_call(
        sentence_cls_kernel,
        out_shape=jax.ShapeDtypeStruct((B, CP), jnp.float32),
        grid_spec=grid_spec,
        compiler_params=pltpu.CompilerParams(
            dimension_semantics=("parallel", "arbitrary"),
            vmem_limit_bytes=vmem_limit,
        ),
    )(h, mask2, w1f, b1f, w2p, b2p)

    return logits_padded[:, :C]


def predict(h, attention_mask, w1, b1, w2, b2, **kw):
    logits = sentence_classification_forward(h, attention_mask, w1, b1, w2, b2, **kw)
    return jnp.argmax(logits, axis=1)


if __name__ == "__main__":
    # Small shapes consistent with the module (E lane-dense at 128, hidden=128).
    B, S, E, HID, C = 16, 256, 128, 128, 8
    VOCAB = 64

    key = jax.random.PRNGKey(0)
    k_emb, k_ids, k_w1, k_b1, k_w2, k_b2 = jax.random.split(key, 6)

    # TODO(synk): the real embedding_model is an opaque nn.Module; stubbed here as a
    # deterministic embedding-table lookup (plain JAX glue outside the kernel).
    emb_table = jax.random.normal(k_emb, (VOCAB, E), dtype=jnp.float32) * 0.1
    input_ids = jax.random.randint(k_ids, (B, S), 0, VOCAB)
    lengths = jnp.clip(8 + 16 * jnp.arange(B), 1, S)                  # per-row valid lengths
    attention_mask = (jnp.arange(S)[None, :] < lengths[:, None]).astype(jnp.int32)
    h = emb_table[input_ids]                                          # (B, S, E) f32

    # Classifier params, stored as (in, out) == torch nn.Linear weight transposed.
    w1 = jax.random.normal(k_w1, (E, HID), dtype=jnp.float32) * 0.05
    b1 = jax.random.normal(k_b1, (HID,), dtype=jnp.float32) * 0.01
    w2 = jax.random.normal(k_w2, (HID, C), dtype=jnp.float32) * 0.05
    b2 = jax.random.normal(k_b2, (C,), dtype=jnp.float32) * 0.01

    fwd = jax.jit(sentence_classification_forward, static_argnames=("tile_b", "tile_s"))

    # 1) Budget-driven auto tiling.
    logits = jax.block_until_ready(fwd(h, attention_mask, w1, b1, w2, b2))
    # 2) Forced multi-step sequence tiling (exercises init / accumulate / finalize).
    logits_tiled = jax.block_until_ready(
        fwd(h, attention_mask, w1, b1, w2, b2, tile_b=8, tile_s=128))

    # Pure-JAX reference of the same math.
    mask_f = attention_mask.astype(jnp.float32)
    denom = jnp.maximum(mask_f.sum(axis=1, keepdims=True), 1.0)
    pooled_ref = (h * mask_f[:, :, None]).sum(axis=1) / denom
    z_ref = jnp.tanh(jnp.dot(pooled_ref, w1, precision=jax.lax.Precision.HIGHEST) + b1)
    ref = jnp.dot(z_ref, w2, precision=jax.lax.Precision.HIGHEST) + b2

    assert logits.shape == (B, C)
    assert jnp.allclose(logits, ref, atol=2e-3, rtol=2e-2), "mismatch vs reference (auto tiles)"
    assert jnp.allclose(logits_tiled, ref, atol=2e-3, rtol=2e-2), "mismatch vs reference (seq-tiled)"

    preds = jax.block_until_ready(predict(h, attention_mask, w1, b1, w2, b2))
    assert preds.shape == (B,)

    print("KERNEL_OK")
</pallas_src>

<mosaic_0001>
module attributes {stable_mosaic.version = 11 : i64} {
  func.func @sentence_cls_kernel(%arg0: i32, %arg1: i32, %arg2: memref<8x256x128xf32, #tpu.memory_space<vmem>>, %arg3: memref<8x256xf32, #tpu.memory_space<vmem>>, %arg4: memref<128x128xf32, #tpu.memory_space<vmem>>, %arg5: memref<1x128xf32, #tpu.memory_space<vmem>>, %arg6: memref<128x128xf32, #tpu.memory_space<vmem>>, %arg7: memref<1x128xf32, #tpu.memory_space<vmem>>, %arg8: memref<8x128xf32, #tpu.memory_space<vmem>>, %arg9: memref<8x128xf32, #tpu.memory_space<vmem>>, %arg10: memref<8x1xf32, #tpu.memory_space<vmem>>) attributes {dimension_semantics = [#tpu.dimension_semantics<parallel>, #tpu.dimension_semantics<arbitrary>], iteration_bounds = array<i64: 2, 1>, scalar_prefetch = 0 : i64, scratch_operands = 2 : i64, tpu.core_type = #tpu.core_type<tc>, window_params = [{transform_indices = @transform_0, window_bounds = array<i64: 8, 256, 128>}, {transform_indices = @transform_1, window_bounds = array<i64: 8, 256>}, {pipeline_mode = #tpu.pipeline_mode<synchronous>, transform_indices = @transform_2, window_bounds = array<i64: 128, 128>}, {pipeline_mode = #tpu.pipeline_mode<synchronous>, transform_indices = @transform_3, window_bounds = array<i64: 1, 128>}, {pipeline_mode = #tpu.pipeline_mode<synchronous>, transform_indices = @transform_4, window_bounds = array<i64: 128, 128>}, {pipeline_mode = #tpu.pipeline_mode<synchronous>, transform_indices = @transform_5, window_bounds = array<i64: 1, 128>}, {transform_indices = @transform_6, window_bounds = array<i64: 8, 128>}]} {
    %c0_i32 = arith.constant 0 : i32
    %0 = arith.cmpi eq, %arg1, %c0_i32 : i32
    %1 = arith.extui %0 : i1 to i32
    %c0_i32_0 = arith.constant 0 : i32
    %2 = arith.cmpi ne, %1, %c0_i32_0 : i32
    scf.if %2 {
      %cst_16 = arith.constant 0.000000e+00 : f32
      %20 = vector.broadcast %cst_16 : f32 to vector<8x128xf32>
      %c0_17 = arith.constant 0 : index
      %c0_18 = arith.constant 0 : index
      %21 = vector.load %arg9[%c0_17, %c0_18] : memref<8x128xf32, #tpu.memory_space<vmem>>, vector<8x128xf32>
      tpu.vector_store %arg9[%c0_17, %c0_18], %20 {strides = array<i32>} : memref<8x128xf32, #tpu.memory_space<vmem>>, vector<8x128xf32>,
      %cst_19 = arith.constant 0.000000e+00 : f32
      %22 = vector.broadcast %cst_19 : f32 to vector<8x1xf32>
      %c0_20 = arith.constant 0 : index
      %c0_21 = arith.constant 0 : index
      %23 = vector.load %arg10[%c0_20, %c0_21] : memref<8x1xf32, #tpu.memory_space<vmem>>, vector<8x1xf32>
      tpu.vector_store %arg10[%c0_20, %c0_21], %22 {strides = array<i32>} : memref<8x1xf32, #tpu.memory_space<vmem>>, vector<8x1xf32>,
    } else {
    }
    %c0 = arith.constant 0 : index
    %c0_1 = arith.constant 0 : index
    %c0_2 = arith.constant 0 : index
    %3 = vector.load %arg2[%c0, %c0_1, %c0_2] : memref<8x256x128xf32, #tpu.memory_space<vmem>>, vector<8x256x128xf32>
    %c0_3 = arith.constant 0 : index
    %c0_4 = arith.constant 0 : index
    %4 = vector.load %arg3[%c0_3, %c0_4] : memref<8x256xf32, #tpu.memory_space<vmem>>, vector<8x256xf32>
    %c0_5 = arith.constant 0 : index
    %c0_6 = arith.constant 0 : index
    %5 = vector.load %arg9[%c0_5, %c0_6] : memref<8x128xf32, #tpu.memory_space<vmem>>, vector<8x128xf32>
    %6 = vector.shape_cast %4 : vector<8x256xf32> to vector<8x256x1xf32>
    %7 = vector.broadcast %6 : vector<8x256x1xf32> to vector<8x256x128xf32>
    %8 = arith.mulf %3, %7 : vector<8x256x128xf32>
    %cst = arith.constant dense<0.000000e+00> : vector<8x128xf32>
    %9 = vector.multi_reduction <add>, %8, %cst [1] : vector<8x256x128xf32> to vector<8x128xf32>
    %10 = arith.addf %5, %9 : vector<8x128xf32>
    %c0_7 = arith.constant 0 : index
    %c0_8 = arith.constant 0 : index
    %11 = vector.load %arg9[%c0_7, %c0_8] : memref<8x128xf32, #tpu.memory_space<vmem>>, vector<8x128xf32>
    tpu.vector_store %arg9[%c0_7, %c0_8], %10 {strides = array<i32>} : memref<8x128xf32, #tpu.memory_space<vmem>>, vector<8x128xf32>,
    %c0_9 = arith.constant 0 : index
    %c0_10 = arith.constant 0 : index
    %12 = vector.load %arg10[%c0_9, %c0_10] : memref<8x1xf32, #tpu.memory_space<vmem>>, vector<8x1xf32>
    %cst_11 = arith.constant dense<0.000000e+00> : vector<8xf32>
    %13 = vector.multi_reduction <add>, %4, %cst_11 [1] : vector<8x256xf32> to vector<8xf32>
    %14 = vector.shape_cast %13 : vector<8xf32> to vector<8x1xf32>
    %15 = arith.addf %12, %14 : vector<8x1xf32>
    %c0_12 = arith.constant 0 : index
    %c0_13 = arith.constant 0 : index
    %16 = vector.load %arg10[%c0_12, %c0_13] : memref<8x1xf32, #tpu.memory_space<vmem>>, vector<8x1xf32>
    tpu.vector_store %arg10[%c0_12, %c0_13], %15 {strides = array<i32>} : memref<8x1xf32, #tpu.memory_space<vmem>>, vector<8x1xf32>,
    %c0_i32_14 = arith.constant 0 : i32
    %17 = arith.cmpi eq, %arg1, %c0_i32_14 : i32
    %18 = arith.extui %17 : i1 to i32
    %c0_i32_15 = arith.constant 0 : i32
    %19 = arith.cmpi ne, %18, %c0_i32_15 : i32
    scf.if %19 {
      %c0_16 = arith.constant 0 : index
      %c0_17 = arith.constant 0 : index
      %20 = vector.load %arg10[%c0_16, %c0_17] : memref<8x1xf32, #tpu.memory_space<vmem>>, vector<8x1xf32>
      %cst_18 = arith.constant 1.000000e+00 : f32
      %21 = vector.broadcast %cst_18 : f32 to vector<8x1xf32>
      %22 = arith.maximumf %20, %21 : vector<8x1xf32>
      %c0_19 = arith.constant 0 : index
      %c0_20 = arith.constant 0 : index
      %23 = vector.load %arg9[%c0_19, %c0_20] : memref<8x128xf32, #tpu.memory_space<vmem>>, vector<8x128xf32>
      %24 = vector.broadcast %22 : vector<8x1xf32> to vector<8x128xf32>
      %25 = arith.divf %23, %24 : vector<8x128xf32>
      %c0_21 = arith.constant 0 : index
      %c0_22 = arith.constant 0 : index
      %26 = vector.load %arg4[%c0_21, %c0_22] : memref<128x128xf32, #tpu.memory_space<vmem>>, vector<128x128xf32>
      %cst_23 = arith.constant dense<0.000000e+00> : vector<8x128xf32>
      %27 = tpu.matmul %25, %26, %cst_23 {dimension_numbers = #tpu.dot_dimension_numbers<[1], [0], [0], [1], [0, 0, 1, 1], [], []>} : vector<8x128xf32>, vector<128x128xf32>, vector<8x128xf32> -> vector<8x128xf32>
      %c0_24 = arith.constant 0 : index
      %c0_25 = arith.constant 0 : index
      %28 = vector.load %arg5[%c0_24, %c0_25] : memref<1x128xf32, #tpu.memory_space<vmem>>, vector<1x128xf32>
      %29 = vector.broadcast %28 : vector<1x128xf32> to vector<8x128xf32>
      %30 = arith.addf %27, %29 : vector<8x128xf32>
      %31 = math.tanh %30 : vector<8x128xf32>
      %c0_26 = arith.constant 0 : index
      %c0_27 = arith.constant 0 : index
      %32 = vector.load %arg6[%c0_26, %c0_27] : memref<128x128xf32, #tpu.memory_space<vmem>>, vector<128x128xf32>
      %cst_28 = arith.constant dense<0.000000e+00> : vector<8x128xf32>
      %33 = tpu.matmul %31, %32, %cst_28 {dimension_numbers = #tpu.dot_dimension_numbers<[1], [0], [0], [1], [0, 0, 1, 1], [], []>} : vector<8x128xf32>, vector<128x128xf32>, vector<8x128xf32> -> vector<8x128xf32>
      %c0_29 = arith.constant 0 : index
      %c0_30 = arith.constant 0 : index
      %34 = vector.load %arg7[%c0_29, %c0_30] : memref<1x128xf32, #tpu.memory_space<vmem>>, vector<1x128xf32>
      %35 = vector.broadcast %34 : vector<1x128xf32> to vector<8x128xf32>
      %36 = arith.addf %33, %35 : vector<8x128xf32>
      %c0_31 = arith.constant 0 : index
      %c0_32 = arith.constant 0 : index
      %37 = vector.load %arg8[%c0_31, %c0_32] : memref<8x128xf32, #tpu.memory_space<vmem>>, vector<8x128xf32>
      tpu.vector_store %arg8[%c0_31, %c0_32], %36 {strides = array<i32>} : memref<8x128xf32, #tpu.memory_space<vmem>>, vector<8x128xf32>,
    } else {
    }
    return
  }
  func.func @transform_0(%arg0: i32, %arg1: i32) -> (i32, i32, i32) {
    %c0_i32 = arith.constant 0 : i32
    %c0_i32_0 = arith.constant 0 : i32
    return %arg0, %arg1, %c0_i32 : i32, i32, i32
  }
  func.func @transform_1(%arg0: i32, %arg1: i32) -> (i32, i32) {
    %c0_i32 = arith.constant 0 : i32
    return %arg0, %arg1 : i32, i32
  }
  func.func @transform_2(%arg0: i32, %arg1: i32) -> (i32, i32) {
    %c0_i32 = arith.constant 0 : i32
    %c0_i32_0 = arith.constant 0 : i32
    %c0_i32_1 = arith.constant 0 : i32
    return %c0_i32, %c0_i32_0 : i32, i32
  }
  func.func @transform_3(%arg0: i32, %arg1: i32) -> (i32, i32) {
    %c0_i32 = arith.constant 0 : i32
    %c0_i32_0 = arith.constant 0 : i32
    %c0_i32_1 = arith.constant 0 : i32
    return %c0_i32, %c0_i32_0 : i32, i32
  }
  func.func @transform_4(%arg0: i32, %arg1: i32) -> (i32, i32) {
    %c0_i32 = arith.constant 0 : i32
    %c0_i32_0 = arith.constant 0 : i32
    %c0_i32_1 = arith.constant 0 : i32
    return %c0_i32, %c0_i32_0 : i32, i32
  }
  func.func @transform_5(%arg0: i32, %arg1: i32) -> (i32, i32) {
    %c0_i32 = arith.constant 0 : i32
    %c0_i32_0 = arith.constant 0 : i32
    %c0_i32_1 = arith.constant 0 : i32
    return %c0_i32, %c0_i32_0 : i32, i32
  }
  func.func @transform_6(%arg0: i32, %arg1: i32) -> (i32, i32) {
    %c0_i32 = arith.constant 0 : i32
    %c0_i32_0 = arith.constant 0 : i32
    return %arg0, %c0_i32 : i32, i32
  }
}

</mosaic_0001>

<llo_original>
// kernel: sentence_classification_forward.1
$region0: #{sentence_classification_forward.1}
  #allocation0 [shape = 'u32[]', space=smem, size = 0x4, offset = 0x4, fixed_abs, tag = 'smem constant byte address 0x4 - core index']
  #allocation1 [shape = 'u32[144,128]{1,0:T(1,128)}', space=vmem, size = 0x12000, scoped, tag = 'internal scratch']
  #allocation2 [shape = 'f32[8,128]{1,0:T(8,128)}', space=vmem, size = 0x1000, scoped, tag = 'scratch operand']
  #allocation3 [shape = 'f32[8,1]{1,0:T(8,128)}', space=vmem, size = 0x1000, scoped, tag = 'scratch operand']
  %s0 = inlined_call_operand.hbm [shape: f32[16,256,128], index: 0, kind: input, shape index: {}]
  %s1 = inlined_call_operand.vmem [shape: f32[16,256], index: 1, kind: input, shape index: {}]
  %s2 = inlined_call_operand.hbm [shape: f32[128,128], index: 2, kind: input, shape index: {}]
  %s3 = inlined_call_operand.hbm [shape: f32[1,128], index: 3, kind: input, shape index: {}]
  %s4 = inlined_call_operand.vmem [shape: f32[128,128], index: 4, kind: input, shape index: {}]
  %s5 = inlined_call_operand.vmem [shape: f32[1,128], index: 5, kind: input, shape index: {}]
  %s6 = inlined_call_operand.vmem [shape: f32[16,128], index: 6, kind: output, shape index: {}]
  %s7 = sld [smem:[#allocation0]]
  $region77: #{sentence_classification_forward.1} parent=0
    _
  %s9 = ssub.s32 1, %s7
  %s10 = scalar_select 0, %s9, %s7
  $region1: #{sentence_classification_forward.1} parent=0
    #allocation4 [shape = 'u8[2097152]{0}', space=vmem, size = 0x200000, scoped, tag = 'input window, operand 0']
    #allocation5 [shape = 's32[2]{0}', space=sflag, size = 0x8, scoped, tag = 'scoped memory for sentence_classification_forward.1']
    #allocation6 [shape = 'u8[65536]{0}', space=vmem, size = 0x10000, scoped, tag = 'input window, operand 2, single buffered']
    #allocation7 [shape = 's32[1]{0}', space=sflag, size = 0x4, scoped, tag = 'scoped memory for sentence_classification_forward.1']
    #allocation8 [shape = 'u8[512]{0}', space=vmem, size = 0x400, scoped, tag = 'input window, operand 3, single buffered']
    %11 = vsyncpa [#allocation5], 0
    %s12 = scalar_lea.sflag [#allocation5], 1
    %13 = vsyncpa %s12, 0
    %14 = vsyncpa [#allocation7], 0
    loop: start=0, step=1, limit=4
    $region2: #{sentence_classification_forward.1} parent=1 // loop_pre_header
      _
    $region3: #{sentence_classification_forward.1} parent=1 // loop_header
      %s16 = sphi 0, %s20
      %p17 = scmp.ge.s32.totalorder %s16, 4
      %s23 = sphi 0, %s35
      %s24 = sphi 0, %s31
      %s25 = sphi 0, %s23
      %s26 = sphi 0, %s24
      %s27 = sphi 0, %s25
      %s28 = sphi 0, %s26
      %s40 = sphi 0, %s42
      %s43 = sphi 0, %s40
      %s44 = sphi 0, %s43
      %s60 = sphi 0, %s44
      %s68 = sphi 0, %s70
      %s71 = sphi 0, %s68
      %s72 = sphi 0, %s71
      %s88 = sphi 0, %s72
      %s92 = sphi 0, %s92
      %s94 = sphi 0, %s92
      %s95 = sphi 0, %s94
      %s109 = sphi 0, %s95
      %s113 = sphi 0, %s113
      %s115 = sphi 0, %s113
      %s116 = sphi 0, %s115
      %s130 = sphi 0, %s116
      %s134 = sphi 0, %s134
      %s136 = sphi 0, %s134
      %s137 = sphi 0, %s136
      %s151 = sphi 0, %s137
      %s155 = sphi 0, %s155
      %s157 = sphi 0, %s155
      %s158 = sphi 0, %s157
      %s172 = sphi 0, %s158
      %s178 = sphi 0, %s180
      %s181 = sphi 0, %s178
      %s182 = sphi 0, %s181
      %s198 = sphi 0, %s182
    $region4: #{sentence_classification_forward.1} parent=1 // loop_header_branch
      %19 = sbr.rel (%p17) target = $region8
    $region5: #{sentence_classification_forward.1} parent=1 // loop_body
      %s21 = ssub.s32 %s16, 1
      %s22 = ssub.s32 %s16, 2
      %s29 = sadd.s32 1, %s24
      %p30 = scmp.ge.s32.totalorder %s29, 1
      %s31 = scalar_select %p30, 0, %s29
      %s32 = sadd.s32 1, %s23
      %s33 = scalar_select %p30, %s32, %s23
      %p34 = scmp.ge.s32.totalorder %s33, 2
      %s35 = scalar_select %p34, 0, %s33
      %s36 = ssub.s32 %s23, %s35
      %s37 = ssub.s32 %s24, %s31
      %s38 = sor.u32 %s36, %s37
      %p39 = scmp.eq.s32.totalorder %s38, 0
      %s41 = sadd.s32 %s40, 1
      %s42 = scalar_select %p39, %s40, %s41
      %p45 = pneg %p39
      %p46 = scmp.eq.s32.totalorder %s16, 1
      %p47 = por %p45, %p46
      %p48 = scmp.ne.s32.totalorder %s40, %s43
      %p49 = scmp.eq.s32.totalorder %s16, 0
      %p50 = por %p48, %p49
      %p51 = scmp.ne.s32.totalorder %s40, %s43
      %p52 = scmp.eq.s32.totalorder %s21, 1
      %p53 = por %p51, %p52
      %p54 = scmp.ne.s32.totalorder %s43, %s44
      %p55 = scmp.eq.s32.totalorder %s21, 0
      %p56 = por %p54, %p55
      %p57 = scmp.ne.s32.totalorder %s43, %s44
      %p58 = scmp.eq.s32.totalorder %s22, 1
      %p59 = por %p57, %p58
      %p61 = scmp.ne.s32.totalorder %s44, %s60
      %p62 = scmp.eq.s32.totalorder %s22, 0
      %p63 = por %p61, %p62
      %s64 = ssub.s32 %s23, %s35
      %s65 = ssub.s32 %s24, %s31
      %s66 = sor.u32 %s64, %s65
      %p67 = scmp.eq.s32.totalorder %s66, 0
      %s69 = sadd.s32 %s68, 1
      %s70 = scalar_select %p67, %s68, %s69
      %p73 = pneg %p67
      %p74 = scmp.eq.s32.totalorder %s16, 1
      %p75 = por %p73, %p74
      %p76 = scmp.ne.s32.totalorder %s68, %s71
      %p77 = scmp.eq.s32.totalorder %s16, 0
      %p78 = por %p76, %p77
      %p79 = scmp.ne.s32.totalorder %s68, %s71
      %p80 = scmp.eq.s32.totalorder %s21, 1
      %p81 = por %p79, %p80
      %p82 = scmp.ne.s32.totalorder %s71, %s72
      %p83 = scmp.eq.s32.totalorder %s21, 0
      %p84 = por %p82, %p83
      %p85 = scmp.ne.s32.totalorder %s71, %s72
      %p86 = scmp.eq.s32.totalorder %s22, 1
      %p87 = por %p85, %p86
      %p89 = scmp.ne.s32.totalorder %s72, %s88
      %p90 = scmp.eq.s32.totalorder %s22, 0
      %p91 = por %p89, %p90
      %s93 = sadd.s32 %s92, 1
      %p96 = scmp.eq.s32.totalorder %s16, 1
      %p97 = scmp.ne.s32.totalorder %s92, %s94
      %p98 = scmp.eq.s32.totalorder %s16, 0
      %p99 = por %p97, %p98
      %p100 = scmp.ne.s32.totalorder %s92, %s94
      %p101 = scmp.eq.s32.totalorder %s21, 1
      %p102 = por %p100, %p101
      %p103 = scmp.ne.s32.totalorder %s94, %s95
      %p104 = scmp.eq.s32.totalorder %s21, 0
      %p105 = por %p103, %p104
      %p106 = scmp.ne.s32.totalorder %s94, %s95
      %p107 = scmp.eq.s32.totalorder %s22, 1
      %p108 = por %p106, %p107
      %p110 = scmp.ne.s32.totalorder %s95, %s109
      %p111 = scmp.eq.s32.totalorder %s22, 0
      %p112 = por %p110, %p111
      %s114 = sadd.s32 %s113, 1
      %p117 = scmp.eq.s32.totalorder %s16, 1
      %p118 = scmp.ne.s32.totalorder %s113, %s115
      %p119 = scmp.eq.s32.totalorder %s16, 0
      %p120 = por %p118, %p119
      %p121 = scmp.ne.s32.totalorder %s113, %s115
      %p122 = scmp.eq.s32.totalorder %s21, 1
      %p123 = por %p121, %p122
      %p124 = scmp.ne.s32.totalorder %s115, %s116
      %p125 = scmp.eq.s32.totalorder %s21, 0
      %p126 = por %p124, %p125
      %p127 = scmp.ne.s32.totalorder %s115, %s116
      %p128 = scmp.eq.s32.totalorder %s22, 1
      %p129 = por %p127, %p128
      %p131 = scmp.ne.s32.totalorder %s116, %s130
      %p132 = scmp.eq.s32.totalorder %s22, 0
      %p133 = por %p131, %p132
      %s135 = sadd.s32 %s134, 1
      %p138 = scmp.eq.s32.totalorder %s16, 1
      %p139 = scmp.ne.s32.totalorder %s134, %s136
      %p140 = scmp.eq.s32.totalorder %s16, 0
      %p141 = por %p139, %p140
      %p142 = scmp.ne.s32.totalorder %s134, %s136
      %p143 = scmp.eq.s32.totalorder %s21, 1
      %p144 = por %p142, %p143
      %p145 = scmp.ne.s32.totalorder %s136, %s137
      %p146 = scmp.eq.s32.totalorder %s21, 0
      %p147 = por %p145, %p146
      %p148 = scmp.ne.s32.totalorder %s136, %s137
      %p149 = scmp.eq.s32.totalorder %s22, 1
      %p150 = por %p148, %p149
      %p152 = scmp.ne.s32.totalorder %s137, %s151
      %p153 = scmp.eq.s32.totalorder %s22, 0
      %p154 = por %p152, %p153
      %s156 = sadd.s32 %s155, 1
      %p159 = scmp.eq.s32.totalorder %s16, 1
      %p160 = scmp.ne.s32.totalorder %s155, %s157
      %p161 = scmp.eq.s32.totalorder %s16, 0
      %p162 = por %p160, %p161
      %p163 = scmp.ne.s32.totalorder %s155, %s157
      %p164 = scmp.eq.s32.totalorder %s21, 1
      %p165 = por %p163, %p164
      %p166 = scmp.ne.s32.totalorder %s157, %s158
      %p167 = scmp.eq.s32.totalorder %s21, 0
      %p168 = por %p166, %p167
      %p169 = scmp.ne.s32.totalorder %s157, %s158
      %p170 = scmp.eq.s32.totalorder %s22, 1
      %p171 = por %p169, %p170
      %p173 = scmp.ne.s32.totalorder %s158, %s172
      %p174 = scmp.eq.s32.totalorder %s22, 0
      %p175 = por %p173, %p174
      %s176 = ssub.s32 %s23, %s35
      %p177 = scmp.eq.s32.totalorder %s176, 0
      %s179 = sadd.s32 %s178, 1
      %s180 = scalar_select %p177, %s178, %s179
      %p183 = pneg %p177
      %p184 = scmp.eq.s32.totalorder %s16, 1
      %p185 = por %p183, %p184
      %p186 = scmp.ne.s32.totalorder %s178, %s181
      %p187 = scmp.eq.s32.totalorder %s16, 0
      %p188 = por %p186, %p187
      %p189 = scmp.ne.s32.totalorder %s178, %s181
      %p190 = scmp.eq.s32.totalorder %s21, 1
      %p191 = por %p189, %p190
      %p192 = scmp.ne.s32.totalorder %s181, %s182
      %p193 = scmp.eq.s32.totalorder %s21, 0
      %p194 = por %p192, %p193
      %p195 = scmp.ne.s32.totalorder %s181, %s182
      %p196 = scmp.eq.s32.totalorder %s22, 1
      %p197 = por %p195, %p196
      %p199 = scmp.ne.s32.totalorder %s182, %s198
      %p200 = scmp.eq.s32.totalorder %s22, 0
      %p201 = por %p199, %p200
      %p202 = scmp.le.s32.totalorder 1, %s16
      %p203 = scmp.lt.s32.totalorder %s16, 3
      %p204 = pnand %p202, %p203
      %p205 = pneg %p204
      // Predicated region
      $region9: #{sentence_classification_forward.1} parent=5 // pred_check
        _
      $region10: #{sentence_classification_forward.1} parent=5 // pred_check_branch
        %207 = sbr.rel (%p204) target = $region12
      $region11: #{sentence_classification_forward.1} parent=5 // pred_region
        %s208 = ssub.s32 %s16, 1
        // Predicated region
        $region13: #{sentence_classification_forward.1} parent=11 // pred_check
          %p209 = pneg %p105
        $region14: #{sentence_classification_forward.1} parent=11 // pred_check_branch
          %211 = sbr.rel (%p209) target = $region16
        $region15: #{sentence_classification_forward.1} parent=11 // pred_region
          %s213 = ssub.s32 2048, 2048
          %214 = vsyncadd [#allocation7], %s213
          %s215 = sshll.u32 [#allocation6], 4
          %s216 = int_to_ptr.vmem [resolvable:$true] %s215
          %221 = dma.hbm_to_vmem [thread:$0]  %s2, 2048, %s216, [#allocation7], 128, 128, 8
        $region16: #{sentence_classification_forward.1} parent=11 // pred_fallthru
          _
        // Predicated region
        $region17: #{sentence_classification_forward.1} parent=11 // pred_check
          %p222 = pneg %p126
        $region18: #{sentence_classification_forward.1} parent=11 // pred_check_branch
          %224 = sbr.rel (%p222) target = $region20
        $region19: #{sentence_classification_forward.1} parent=11 // pred_region
          %s226 = ssub.s32 16, 16
          %227 = vsyncadd [#allocation7], %s226
          %s229 = sshll.u32 [#allocation8], 4
          %s230 = int_to_ptr.vmem [resolvable:$true] %s229
          %232 = dma.hbm_to_vmem [thread:$0]  %s3, 16, %s230, [#allocation7]
        $region20: #{sentence_classification_forward.1} parent=11 // pred_fallthru
          _
        // Predicated region
        $region21: #{sentence_classification_forward.1} parent=11 // pred_check
          %p233 = pneg %p147
        $region22: #{sentence_classification_forward.1} parent=11 // pred_check_branch
          %235 = sbr.rel (%p233) target = $region24
        $region23: #{sentence_classification_forward.1} parent=11 // pred_region
          _
        $region24: #{sentence_classification_forward.1} parent=11 // pred_fallthru
          _
        // Predicated region
        $region25: #{sentence_classification_forward.1} parent=11 // pred_check
          %p236 = pneg %p168
        $region26: #{sentence_classification_forward.1} parent=11 // pred_check_branch
          %238 = sbr.rel (%p236) target = $region28
        $region27: #{sentence_classification_forward.1} parent=11 // pred_region
          _
        $region28: #{sentence_classification_forward.1} parent=11 // pred_fallthru
          _
      $region12: #{sentence_classification_forward.1} parent=5 // pred_fallthru
        _
      %p239 = scmp.lt.s32.totalorder %s16, 2
      // Predicated region
      $region29: #{sentence_classification_forward.1} parent=5 // pred_check
        %p240 = pneg %p239
      $region30: #{sentence_classification_forward.1} parent=5 // pred_check_branch
        %242 = sbr.rel (%p240) target = $region32
      $region31: #{sentence_classification_forward.1} parent=5 // pred_region
        // Predicated region
        $region33: #{sentence_classification_forward.1} parent=31 // pred_check
          %p243 = pneg %p50
        $region34: #{sentence_classification_forward.1} parent=31 // pred_check_branch
          %245 = sbr.rel (%p243) target = $region36
        $region35: #{sentence_classification_forward.1} parent=31 // pred_region
          %s246 = sand.u32 %s40, 1
          %s247 = scalar_lea.sflag [#allocation5], %s246
          %s248 = sand.u32 %s40, 1
          %s249 = smul.addr %s248, 2048
          %s250 = scalar_lea.vmem [#allocation4], %s249
          %s251 = smul.u32 8, %s23
          %s252 = smul.u32 32, %s24
          %s254 = ssub.s32 32768, 32768
          %255 = vsyncadd %s247, %s254
          %s256 = smul.addr %s251, 32
          %s257 = sadd.s32 %s252, %s256
          %s258 = smul.addr %s257, 128
          %s259 = scalar_lea.hbm %s0, %s258
          %s260 = sshll.u32 %s250, 4
          %s261 = int_to_ptr.vmem [resolvable:$true] %s260
          %266 = dma.hbm_to_vmem [thread:$0]  %s259, 32768, %s261, %s247, 128, 128, 8
        $region36: #{sentence_classification_forward.1} parent=31 // pred_fallthru
          _
        // Predicated region
        $region37: #{sentence_classification_forward.1} parent=31 // pred_check
          %p267 = pneg %p78
        $region38: #{sentence_classification_forward.1} parent=31 // pred_check_branch
          %269 = sbr.rel (%p267) target = $region40
        $region39: #{sentence_classification_forward.1} parent=31 // pred_region
          %s270 = smul.u32 2, %s24
          %p271 = scmp.lt.s32.totalorder %s23, 1
          %s272 = scalar_select %p271, %s23, 1
          %p273 = scmp.lt.s32.totalorder %s270, 1
          %s274 = scalar_select %p273, %s270, 1
          %s275 = smul.addr %s272, 2
          %s276 = sadd.s32 %s274, %s275
          %s277 = smul.addr %s276, 8
          %s278 = scalar_lea.vmem %s1, %s277
          %s279 = smul.u32 2, %s24
        $region40: #{sentence_classification_forward.1} parent=31 // pred_fallthru
          _
      $region32: #{sentence_classification_forward.1} parent=5 // pred_fallthru
        _
      %p280 = scmp.le.s32.totalorder 1, %s16
      %p281 = scmp.lt.s32.totalorder %s16, 3
      %p282 = pnand %p280, %p281
      %p283 = pneg %p282
      // Predicated region
      $region41: #{sentence_classification_forward.1} parent=5 // pred_check
        _
      $region42: #{sentence_classification_forward.1} parent=5 // pred_check_branch
        %285 = sbr.rel (%p282) target = $region44
      $region43: #{sentence_classification_forward.1} parent=5 // pred_region
        %s286 = ssub.s32 %s16, 1
        %s287 = sand.u32 %s43, 1
        %s288 = scalar_lea.sflag [#allocation5], %s287
        %s289 = sand.u32 %s43, 1
        %s290 = smul.addr %s289, 2048
        %s291 = scalar_lea.vmem [#allocation4], %s290
        // Predicated region
        $region45: #{sentence_classification_forward.1} parent=43 // pred_check
          %p292 = pneg %p56
        $region46: #{sentence_classification_forward.1} parent=43 // pred_check_branch
          %294 = sbr.rel (%p292) target = $region48
        $region47: #{sentence_classification_forward.1} parent=43 // pred_region
          %295 = dma.done %s288, 32768
        $region48: #{sentence_classification_forward.1} parent=43 // pred_fallthru
          _
        // Predicated region
        $region49: #{sentence_classification_forward.1} parent=43 // pred_check
          %p296 = pneg %p105
        $region50: #{sentence_classification_forward.1} parent=43 // pred_check_branch
          %298 = sbr.rel (%p296) target = $region52
        $region51: #{sentence_classification_forward.1} parent=43 // pred_region
          %299 = dma.done [#allocation7], 2048
        $region52: #{sentence_classification_forward.1} parent=43 // pred_fallthru
          _
        // Predicated region
        $region53: #{sentence_classification_forward.1} parent=43 // pred_check
          %p300 = pneg %p126
        $region54: #{sentence_classification_forward.1} parent=43 // pred_check_branch
          %302 = sbr.rel (%p300) target = $region56
        $region55: #{sentence_classification_forward.1} parent=43 // pred_region
          %303 = dma.done [#allocation7], 16
        $region56: #{sentence_classification_forward.1} parent=43 // pred_fallthru
          _
        %s304 = sand.u32 %s43, 1
        %s305 = scalar_lea.sflag [#allocation5], %s304
        %s306 = sand.u32 %s43, 1
        %s307 = smul.addr %s306, 2048
        %s308 = scalar_lea.vmem [#allocation4], %s307
        %p309 = pneg %p56
        %p310 = pneg %p53
        %s311 = smul.u32 2, %s26
        %p312 = scmp.lt.s32.totalorder %s25, 1
        %s313 = scalar_select %p312, %s25, 1
        %p314 = scmp.lt.s32.totalorder %s311, 1
        %s315 = scalar_select %p314, %s311, 1
        %s316 = smul.addr %s313, 2
        %s317 = sadd.s32 %s315, %s316
        %s318 = smul.addr %s317, 8
        %s319 = scalar_lea.vmem %s1, %s318
        %p320 = pneg %p84
        %p321 = pneg %p81
        %p322 = pneg %p105
        %p323 = pneg %p102
        %p324 = pneg %p126
        %p325 = pneg %p123
        %p326 = pneg %p147
        %p327 = pneg %p144
        %p328 = pneg %p168
        %p329 = pneg %p165
        %p330 = pneg %p194
        %p331 = pneg %p191
        %p332 = scmp.lt.s32.totalorder %s25, 1
        %s333 = scalar_select %p332, %s25, 1
        %s334 = smul.addr %s333, 8
        %s335 = scalar_lea.vmem %s6, %s334
        %s336 = smul.u32 8, %s25
        %s337 = smul.u32 32, %s26
        %s338 = smul.u32 2, %s26
        %p339 = scmp.lt.s32.totalorder %s25, 1
        %s340 = scalar_select %p339, %s25, 1
        %p341 = scmp.lt.s32.totalorder %s338, 1
        %s342 = scalar_select %p341, %s338, 1
        %s343 = smul.addr %s340, 2
        %s344 = sadd.s32 %s342, %s343
        %s345 = smul.addr %s344, 8
        %s346 = scalar_lea.vmem %s1, %s345
        %s347 = smul.u32 2, %s26
        %p348 = scmp.lt.s32.totalorder %s25, 1
        %s349 = scalar_select %p348, %s25, 1
        %s350 = smul.addr %s349, 8
        %s351 = scalar_lea.vmem %s6, %s350
        %p352 = scmp.eq.s32.totalorder %s26, 0
        // Predicated region
        $region57: #{sentence_classification_forward.1} parent=43 // pred_check
          %p353 = pneg %p352
        $region58: #{sentence_classification_forward.1} parent=43 // pred_check_branch
          %355 = sbr.rel (%p353) target = $region60
        $region59: #{sentence_classification_forward.1} parent=43 // pred_region
          %356 = vst [vmem:[#allocation2] sm:$0xff] 0.0
          %vm357 = vcmask 7168
          %358 = vst.msk [vmem:[#allocation3] sm:$0xff] %vm357, 0.0
        $region60: #{sentence_classification_forward.1} parent=43 // pred_fallthru
          _
        %v359 = vld [vmem:[%s291] sm:$0xff]
        %v360 = vld [vmem:[%s291 + $0x8] sm:$0xff]
        %v361 = vld [vmem:[%s291 + $0x10] sm:$0xff]
        %v362 = vld [vmem:[%s291 + $0x18] sm:$0xff]
        %v363 = vld [vmem:[%s291 + $0x20] sm:$0xff]
        %v364 = vld [vmem:[%s291 + $0x28] sm:$0xff]
        %v365 = vld [vmem:[%s291 + $0x30] sm:$0xff]
        %v366 = vld [vmem:[%s291 + $0x38] sm:$0xff]
        %v367 = vld [vmem:[%s291 + $0x40] sm:$0xff]
        %v368 = vld [vmem:[%s291 + $0x48] sm:$0xff]
        %v369 = vld [vmem:[%s291 + $0x50] sm:$0xff]
        %v370 = vld [vmem:[%s291 + $0x58] sm:$0xff]
        %v371 = vld [vmem:[%s291 + $0x60] sm:$0xff]
        %v372 = vld [vmem:[%s291 + $0x68] sm:$0xff]
        %v373 = vld [vmem:[%s291 + $0x70] sm:$0xff]
        %v374 = vld [vmem:[%s291 + $0x78] sm:$0xff]
        %v375 = vld [vmem:[%s291 + $0x80] sm:$0xff]
        %v376 = vld [vmem:[%s291 + $0x88] sm:$0xff]
        %v377 = vld [vmem:[%s291 + $0x90] sm:$0xff]
        %v378 = vld [vmem:[%s291 + $0x98] sm:$0xff]
        %v379 = vld [vmem:[%s291 + $0xa0] sm:$0xff]
        %v380 = vld [vmem:[%s291 + $0xa8] sm:$0xff]
        %v381 = vld [vmem:[%s291 + $0xb0] sm:$0xff]
        %v382 = vld [vmem:[%s291 + $0xb8] sm:$0xff]
        %v383 = vld [vmem:[%s291 + $0xc0] sm:$0xff]
        %v384 = vld [vmem:[%s291 + $0xc8] sm:$0xff]
        %v385 = vld [vmem:[%s291 + $0xd0] sm:$0xff]
        %v386 = vld [vmem:[%s291 + $0xd8] sm:$0xff]
        %v387 = vld [vmem:[%s291 + $0xe0] sm:$0xff]
        %v388 = vld [vmem:[%s291 + $0xe8] sm:$0xff]
        %v389 = vld [vmem:[%s291 + $0xf0] sm:$0xff]
        %v390 = vld [vmem:[%s291 + $0xf8] sm:$0xff]
        %v391 = vld [vmem:[%s291 + $0x100] sm:$0xff]
        %v392 = vld [vmem:[%s291 + $0x108] sm:$0xff]
        %v393 = vld [vmem:[%s291 + $0x110] sm:$0xff]
        %v394 = vld [vmem:[%s291 + $0x118] sm:$0xff]
        %v395 = vld [vmem:[%s291 + $0x120] sm:$0xff]
        %v396 = vld [vmem:[%s291 + $0x128] sm:$0xff]
        %v397 = vld [vmem:[%s291 + $0x130] sm:$0xff]
        %v398 = vld [vmem:[%s291 + $0x138] sm:$0xff]
        %v399 = vld [vmem:[%s291 + $0x140] sm:$0xff]
        %v400 = vld [vmem:[%s291 + $0x148] sm:$0xff]
        %v401 = vld [vmem:[%s291 + $0x150] sm:$0xff]
        %v402 = vld [vmem:[%s291 + $0x158] sm:$0xff]
        %v403 = vld [vmem:[%s291 + $0x160] sm:$0xff]
        %v404 = vld [vmem:[%s291 + $0x168] sm:$0xff]
        %v405 = vld [vmem:[%s291 + $0x170] sm:$0xff]
        %v406 = vld [vmem:[%s291 + $0x178] sm:$0xff]
        %v407 = vld [vmem:[%s291 + $0x180] sm:$0xff]
        %v408 = vld [vmem:[%s291 + $0x188] sm:$0xff]
        %v409 = vld [vmem:[%s291 + $0x190] sm:$0xff]
        %v410 = vld [vmem:[%s291 + $0x198] sm:$0xff]
        %v411 = vld [vmem:[%s291 + $0x1a0] sm:$0xff]
        %v412 = vld [vmem:[%s291 + $0x1a8] sm:$0xff]
        %v413 = vld [vmem:[%s291 + $0x1b0] sm:$0xff]
        %v414 = vld [vmem:[%s291 + $0x1b8] sm:$0xff]
        %v415 = vld [vmem:[%s291 + $0x1c0] sm:$0xff]
        %v416 = vld [vmem:[%s291 + $0x1c8] sm:$0xff]
        %v417 = vld [vmem:[%s291 + $0x1d0] sm:$0xff]
        %v418 = vld [vmem:[%s291 + $0x1d8] sm:$0xff]
        %v419 = vld [vmem:[%s291 + $0x1e0] sm:$0xff]
        %v420 = vld [vmem:[%s291 + $0x1e8] sm:$0xff]
        %v421 = vld [vmem:[%s291 + $0x1f0] sm:$0xff]
        %v422 = vld [vmem:[%s291 + $0x1f8] sm:$0xff]
        %v423 = vld [vmem:[%s291 + $0x200] sm:$0xff]
        %v424 = vld [vmem:[%s291 + $0x208] sm:$0xff]
        %v425 = vld [vmem:[%s291 + $0x210] sm:$0xff]
        %v426 = vld [vmem:[%s291 + $0x218] sm:$0xff]
        %v427 = vld [vmem:[%s291 + $0x220] sm:$0xff]
        %v428 = vld [vmem:[%s291 + $0x228] sm:$0xff]
        %v429 = vld [vmem:[%s291 + $0x230] sm:$0xff]
        %v430 = vld [vmem:[%s291 + $0x238] sm:$0xff]
        %v431 = vld [vmem:[%s291 + $0x240] sm:$0xff]
        %v432 = vld [vmem:[%s291 + $0x248] sm:$0xff]
        %v433 = vld [vmem:[%s291 + $0x250] sm:$0xff]
        %v434 = vld [vmem:[%s291 + $0x258] sm:$0xff]
        %v435 = vld [vmem:[%s291 + $0x260] sm:$0xff]
        %v436 = vld [vmem:[%s291 + $0x268] sm:$0xff]
        %v437 = vld [vmem:[%s291 + $0x270] sm:$0xff]
        %v438 = vld [vmem:[%s291 + $0x278] sm:$0xff]
        %v439 = vld [vmem:[%s291 + $0x280] sm:$0xff]
        %v440 = vld [vmem:[%s291 + $0x288] sm:$0xff]
        %v441 = vld [vmem:[%s291 + $0x290] sm:$0xff]
        %v442 = vld [vmem:[%s291 + $0x298] sm:$0xff]
        %v443 = vld [vmem:[%s291 + $0x2a0] sm:$0xff]
        %v444 = vld [vmem:[%s291 + $0x2a8] sm:$0xff]
        %v445 = vld [vmem:[%s291 + $0x2b0] sm:$0xff]
        %v446 = vld [vmem:[%s291 + $0x2b8] sm:$0xff]
        %v447 = vld [vmem:[%s291 + $0x2c0] sm:$0xff]
        %v448 = vld [vmem:[%s291 + $0x2c8] sm:$0xff]
        %v449 = vld [vmem:[%s291 + $0x2d0] sm:$0xff]
        %v450 = vld [vmem:[%s291 + $0x2d8] sm:$0xff]
        %v451 = vld [vmem:[%s291 + $0x2e0] sm:$0xff]
        %v452 = vld [vmem:[%s291 + $0x2e8] sm:$0xff]
        %v453 = vld [vmem:[%s291 + $0x2f0] sm:$0xff]
        %v454 = vld [vmem:[%s291 + $0x2f8] sm:$0xff]
        %v455 = vld [vmem:[%s291 + $0x300] sm:$0xff]
        %v456 = vld [vmem:[%s291 + $0x308] sm:$0xff]
        %v457 = vld [vmem:[%s291 + $0x310] sm:$0xff]
        %v458 = vld [vmem:[%s291 + $0x318] sm:$0xff]
        %v459 = vld [vmem:[%s291 + $0x320] sm:$0xff]
        %v460 = vld [vmem:[%s291 + $0x328] sm:$0xff]
        %v461 = vld [vmem:[%s291 + $0x330] sm:$0xff]
        %v462 = vld [vmem:[%s291 + $0x338] sm:$0xff]
        %v463 = vld [vmem:[%s291 + $0x340] sm:$0xff]
        %v464 = vld [vmem:[%s291 + $0x348] sm:$0xff]
        %v465 = vld [vmem:[%s291 + $0x350] sm:$0xff]
        %v466 = vld [vmem:[%s291 + $0x358] sm:$0xff]
        %v467 = vld [vmem:[%s291 + $0x360] sm:$0xff]
        %v468 = vld [vmem:[%s291 + $0x368] sm:$0xff]
        %v469 = vld [vmem:[%s291 + $0x370] sm:$0xff]
        %v470 = vld [vmem:[%s291 + $0x378] sm:$0xff]
        %v471 = vld [vmem:[%s291 + $0x380] sm:$0xff]
        %v472 = vld [vmem:[%s291 + $0x388] sm:$0xff]
        %v473 = vld [vmem:[%s291 + $0x390] sm:$0xff]
        %v474 = vld [vmem:[%s291 + $0x398] sm:$0xff]
        %v475 = vld [vmem:[%s291 + $0x3a0] sm:$0xff]
        %v476 = vld [vmem:[%s291 + $0x3a8] sm:$0xff]
        %v477 = vld [vmem:[%s291 + $0x3b0] sm:$0xff]
        %v478 = vld [vmem:[%s291 + $0x3b8] sm:$0xff]
        %v479 = vld [vmem:[%s291 + $0x3c0] sm:$0xff]
        %v480 = vld [vmem:[%s291 + $0x3c8] sm:$0xff]
        %v481 = vld [vmem:[%s291 + $0x3d0] sm:$0xff]
        %v482 = vld [vmem:[%s291 + $0x3d8] sm:$0xff]
        %v483 = vld [vmem:[%s291 + $0x3e0] sm:$0xff]
        %v484 = vld [vmem:[%s291 + $0x3e8] sm:$0xff]
        %v485 = vld [vmem:[%s291 + $0x3f0] sm:$0xff]
        %v486 = vld [vmem:[%s291 + $0x3f8] sm:$0xff]
        %v487 = vld [vmem:[%s291 + $0x400] sm:$0xff]
        %v488 = vld [vmem:[%s291 + $0x408] sm:$0xff]
        %v489 = vld [vmem:[%s291 + $0x410] sm:$0xff]
        %v490 = vld [vmem:[%s291 + $0x418] sm:$0xff]
        %v491 = vld [vmem:[%s291 + $0x420] sm:$0xff]
        %v492 = vld [vmem:[%s291 + $0x428] sm:$0xff]
        %v493 = vld [vmem:[%s291 + $0x430] sm:$0xff]
        %v494 = vld [vmem:[%s291 + $0x438] sm:$0xff]
        %v495 = vld [vmem:[%s291 + $0x440] sm:$0xff]
        %v496 = vld [vmem:[%s291 + $0x448] sm:$0xff]
        %v497 = vld [vmem:[%s291 + $0x450] sm:$0xff]
        %v498 = vld [vmem:[%s291 + $0x458] sm:$0xff]
        %v499 = vld [vmem:[%s291 + $0x460] sm:$0xff]
        %v500 = vld [vmem:[%s291 + $0x468] sm:$0xff]
        %v501 = vld [vmem:[%s291 + $0x470] sm:$0xff]
        %v502 = vld [vmem:[%s291 + $0x478] sm:$0xff]
        %v503 = vld [vmem:[%s291 + $0x480] sm:$0xff]
        %v504 = vld [vmem:[%s291 + $0x488] sm:$0xff]
        %v505 = vld [vmem:[%s291 + $0x490] sm:$0xff]
        %v506 = vld [vmem:[%s291 + $0x498] sm:$0xff]
        %v507 = vld [vmem:[%s291 + $0x4a0] sm:$0xff]
        %v508 = vld [vmem:[%s291 + $0x4a8] sm:$0xff]
        %v509 = vld [vmem:[%s291 + $0x4b0] sm:$0xff]
        %v510 = vld [vmem:[%s291 + $0x4b8] sm:$0xff]
        %v511 = vld [vmem:[%s291 + $0x4c0] sm:$0xff]
        %v512 = vld [vmem:[%s291 + $0x4c8] sm:$0xff]
        %v513 = vld [vmem:[%s291 + $0x4d0] sm:$0xff]
        %v514 = vld [vmem:[%s291 + $0x4d8] sm:$0xff]
        %v515 = vld [vmem:[%s291 + $0x4e0] sm:$0xff]
        %v516 = vld [vmem:[%s291 + $0x4e8] sm:$0xff]
        %v517 = vld [vmem:[%s291 + $0x4f0] sm:$0xff]
        %v518 = vld [vmem:[%s291 + $0x4f8] sm:$0xff]
        %v519 = vld [vmem:[%s291 + $0x500] sm:$0xff]
        %v520 = vld [vmem:[%s291 + $0x508] sm:$0xff]
        %v521 = vld [vmem:[%s291 + $0x510] sm:$0xff]
        %v522 = vld [vmem:[%s291 + $0x518] sm:$0xff]
        %v523 = vld [vmem:[%s291 + $0x520] sm:$0xff]
        %v524 = vld [vmem:[%s291 + $0x528] sm:$0xff]
        %v525 = vld [vmem:[%s291 + $0x530] sm:$0xff]
        %v526 = vld [vmem:[%s291 + $0x538] sm:$0xff]
        %v527 = vld [vmem:[%s291 + $0x540] sm:$0xff]
        %v528 = vld [vmem:[%s291 + $0x548] sm:$0xff]
        %v529 = vld [vmem:[%s291 + $0x550] sm:$0xff]
        %v530 = vld [vmem:[%s291 + $0x558] sm:$0xff]
        %v531 = vld [vmem:[%s291 + $0x560] sm:$0xff]
        %v532 = vld [vmem:[%s291 + $0x568] sm:$0xff]
        %v533 = vld [vmem:[%s291 + $0x570] sm:$0xff]
        %v534 = vld [vmem:[%s291 + $0x578] sm:$0xff]
        %v535 = vld [vmem:[%s291 + $0x580] sm:$0xff]
        %v536 = vld [vmem:[%s291 + $0x588] sm:$0xff]
        %v537 = vld [vmem:[%s291 + $0x590] sm:$0xff]
        %v538 = vld [vmem:[%s291 + $0x598] sm:$0xff]
        %v539 = vld [vmem:[%s291 + $0x5a0] sm:$0xff]
        %v540 = vld [vmem:[%s291 + $0x5a8] sm:$0xff]
        %v541 = vld [vmem:[%s291 + $0x5b0] sm:$0xff]
        %v542 = vld [vmem:[%s291 + $0x5b8] sm:$0xff]
        %v543 = vld [vmem:[%s291 + $0x5c0] sm:$0xff]
        %v544 = vld [vmem:[%s291 + $0x5c8] sm:$0xff]
        %v545 = vld [vmem:[%s291 + $0x5d0] sm:$0xff]
        %v546 = vld [vmem:[%s291 + $0x5d8] sm:$0xff]
        %v547 = vld [vmem:[%s291 + $0x5e0] sm:$0xff]
        %v548 = vld [vmem:[%s291 + $0x5e8] sm:$0xff]
        %v549 = vld [vmem:[%s291 + $0x5f0] sm:$0xff]
        %v550 = vld [vmem:[%s291 + $0x5f8] sm:$0xff]
        %v551 = vld [vmem:[%s291 + $0x600] sm:$0xff]
        %v552 = vld [vmem:[%s291 + $0x608] sm:$0xff]
        %v553 = vld [vmem:[%s291 + $0x610] sm:$0xff]
        %v554 = vld [vmem:[%s291 + $0x618] sm:$0xff]
        %v555 = vld [vmem:[%s291 + $0x620] sm:$0xff]
        %v556 = vld [vmem:[%s291 + $0x628] sm:$0xff]
        %v557 = vld [vmem:[%s291 + $0x630] sm:$0xff]
        %v558 = vld [vmem:[%s291 + $0x638] sm:$0xff]
        %v559 = vld [vmem:[%s291 + $0x640] sm:$0xff]
        %v560 = vld [vmem:[%s291 + $0x648] sm:$0xff]
        %v561 = vld [vmem:[%s291 + $0x650] sm:$0xff]
        %v562 = vld [vmem:[%s291 + $0x658] sm:$0xff]
        %v563 = vld [vmem:[%s291 + $0x660] sm:$0xff]
        %v564 = vld [vmem:[%s291 + $0x668] sm:$0xff]
        %v565 = vld [vmem:[%s291 + $0x670] sm:$0xff]
        %v566 = vld [vmem:[%s291 + $0x678] sm:$0xff]
        %v567 = vld [vmem:[%s291 + $0x680] sm:$0xff]
        %v568 = vld [vmem:[%s291 + $0x688] sm:$0xff]
        %v569 = vld [vmem:[%s291 + $0x690] sm:$0xff]
        %v570 = vld [vmem:[%s291 + $0x698] sm:$0xff]
        %v571 = vld [vmem:[%s291 + $0x6a0] sm:$0xff]
        %v572 = vld [vmem:[%s291 + $0x6a8] sm:$0xff]
        %v573 = vld [vmem:[%s291 + $0x6b0] sm:$0xff]
        %v574 = vld [vmem:[%s291 + $0x6b8] sm:$0xff]
        %v575 = vld [vmem:[%s291 + $0x6c0] sm:$0xff]
        %v576 = vld [vmem:[%s291 + $0x6c8] sm:$0xff]
        %v577 = vld [vmem:[%s291 + $0x6d0] sm:$0xff]
        %v578 = vld [vmem:[%s291 + $0x6d8] sm:$0xff]
        %v579 = vld [vmem:[%s291 + $0x6e0] sm:$0xff]
        %v580 = vld [vmem:[%s291 + $0x6e8] sm:$0xff]
        %v581 = vld [vmem:[%s291 + $0x6f0] sm:$0xff]
        %v582 = vld [vmem:[%s291 + $0x6f8] sm:$0xff]
        %v583 = vld [vmem:[%s291 + $0x700] sm:$0xff]
        %v584 = vld [vmem:[%s291 + $0x708] sm:$0xff]
        %v585 = vld [vmem:[%s291 + $0x710] sm:$0xff]
        %v586 = vld [vmem:[%s291 + $0x718] sm:$0xff]
        %v587 = vld [vmem:[%s291 + $0x720] sm:$0xff]
        %v588 = vld [vmem:[%s291 + $0x728] sm:$0xff]
        %v589 = vld [vmem:[%s291 + $0x730] sm:$0xff]
        %v590 = vld [vmem:[%s291 + $0x738] sm:$0xff]
        %v591 = vld [vmem:[%s291 + $0x740] sm:$0xff]
        %v592 = vld [vmem:[%s291 + $0x748] sm:$0xff]
        %v593 = vld [vmem:[%s291 + $0x750] sm:$0xff]
        %v594 = vld [vmem:[%s291 + $0x758] sm:$0xff]
        %v595 = vld [vmem:[%s291 + $0x760] sm:$0xff]
        %v596 = vld [vmem:[%s291 + $0x768] sm:$0xff]
        %v597 = vld [vmem:[%s291 + $0x770] sm:$0xff]
        %v598 = vld [vmem:[%s291 + $0x778] sm:$0xff]
        %v599 = vld [vmem:[%s291 + $0x780] sm:$0xff]
        %v600 = vld [vmem:[%s291 + $0x788] sm:$0xff]
        %v601 = vld [vmem:[%s291 + $0x790] sm:$0xff]
        %v602 = vld [vmem:[%s291 + $0x798] sm:$0xff]
        %v603 = vld [vmem:[%s291 + $0x7a0] sm:$0xff]
        %v604 = vld [vmem:[%s291 + $0x7a8] sm:$0xff]
        %v605 = vld [vmem:[%s291 + $0x7b0] sm:$0xff]
        %v606 = vld [vmem:[%s291 + $0x7b8] sm:$0xff]
        %v607 = vld [vmem:[%s291 + $0x7c0] sm:$0xff]
        %v608 = vld [vmem:[%s291 + $0x7c8] sm:$0xff]
        %v609 = vld [vmem:[%s291 + $0x7d0] sm:$0xff]
        %v610 = vld [vmem:[%s291 + $0x7d8] sm:$0xff]
        %v611 = vld [vmem:[%s291 + $0x7e0] sm:$0xff]
        %v612 = vld [vmem:[%s291 + $0x7e8] sm:$0xff]
        %v613 = vld [vmem:[%s291 + $0x7f0] sm:$0xff]
        %v614 = vld [vmem:[%s291 + $0x7f8] sm:$0xff]
        %v615 = vld [vmem:[%s346] sm:$0xff]
        %v616 = vld [vmem:[%s346 + $0x8] sm:$0xff]
        %v617 = vld [vmem:[#allocation2] sm:$0xff]
        %v618 = vlaneseq
        %v619 = vshrl.u32 %v618, 7
        %v620 = vsub.s32 0, %v619
        %v621 = vrot.slane %v615, %v620
        %623 = vbcast.lane.b32.xlu0 %v621, 256
        %v624 = vpop.permute.xlu0 %623
        %s626 = sor.u32 256, 8
        %627 = vbcast.lane.b32.xlu0 %v621, %s626
        %v628 = vpop.permute.xlu0 %627
        %s630 = sor.u32 256, 16
        %631 = vbcast.lane.b32.xlu0 %v621, %s630
        %v632 = vpop.permute.xlu0 %631
        %s634 = sor.u32 256, 24
        %635 = vbcast.lane.b32.xlu0 %v621, %s634
        %v636 = vpop.permute.xlu0 %635
        %s638 = sor.u32 256, 32
        %639 = vbcast.lane.b32.xlu0 %v621, %s638
        %v640 = vpop.permute.xlu0 %639
        %s642 = sor.u32 256, 40
        %643 = vbcast.lane.b32.xlu0 %v621, %s642
        %v644 = vpop.permute.xlu0 %643
        %s646 = sor.u32 256, 48
        %647 = vbcast.lane.b32.xlu0 %v621, %s646
        %v648 = vpop.permute.xlu0 %647
        %s650 = sor.u32 256, 56
        %651 = vbcast.lane.b32.xlu0 %v621, %s650
        %v652 = vpop.permute.xlu0 %651
        %s654 = sor.u32 256, 64
        %655 = vbcast.lane.b32.xlu0 %v621, %s654
        %v656 = vpop.permute.xlu0 %655
        %s658 = sor.u32 256, 72
        %659 = vbcast.lane.b32.xlu0 %v621, %s658
        %v660 = vpop.permute.xlu0 %659
        %s662 = sor.u32 256, 80
        %663 = vbcast.lane.b32.xlu0 %v621, %s662
        %v664 = vpop.permute.xlu0 %663
        %s666 = sor.u32 256, 88
        %667 = vbcast.lane.b32.xlu0 %v621, %s666
        %v668 = vpop.permute.xlu0 %667
        %s670 = sor.u32 256, 96
        %671 = vbcast.lane.b32.xlu0 %v621, %s670
        %v672 = vpop.permute.xlu0 %671
        %s674 = sor.u32 256, 104
        %675 = vbcast.lane.b32.xlu0 %v621, %s674
        %v676 = vpop.permute.xlu0 %675
        %s678 = sor.u32 256, 112
        %679 = vbcast.lane.b32.xlu0 %v621, %s678
        %v680 = vpop.permute.xlu0 %679
        %s682 = sor.u32 256, 120
        %683 = vbcast.lane.b32.xlu0 %v621, %s682
        %v684 = vpop.permute.xlu0 %683
        %v685 = vlaneseq
        %v686 = vshrl.u32 %v685, 7
        %v687 = vsub.s32 0, %v686
        %v688 = vrot.slane %v616, %v687
        %690 = vbcast.lane.b32.xlu0 %v688, 256
        %v691 = vpop.permute.xlu0 %690
        %s693 = sor.u32 256, 8
        %694 = vbcast.lane.b32.xlu0 %v688, %s693
        %v695 = vpop.permute.xlu0 %694
        %s697 = sor.u32 256, 16
        %698 = vbcast.lane.b32.xlu0 %v688, %s697
        %v699 = vpop.permute.xlu0 %698
        %s701 = sor.u32 256, 24
        %702 = vbcast.lane.b32.xlu0 %v688, %s701
        %v703 = vpop.permute.xlu0 %702
        %s705 = sor.u32 256, 32
        %706 = vbcast.lane.b32.xlu0 %v688, %s705
        %v707 = vpop.permute.xlu0 %706
        %s709 = sor.u32 256, 40
        %710 = vbcast.lane.b32.xlu0 %v688, %s709
        %v711 = vpop.permute.xlu0 %710
        %s713 = sor.u32 256, 48
        %714 = vbcast.lane.b32.xlu0 %v688, %s713
        %v715 = vpop.permute.xlu0 %714
        %s717 = sor.u32 256, 56
        %718 = vbcast.lane.b32.xlu0 %v688, %s717
        %v719 = vpop.permute.xlu0 %718
        %s721 = sor.u32 256, 64
        %722 = vbcast.lane.b32.xlu0 %v688, %s721
        %v723 = vpop.permute.xlu0 %722
        %s725 = sor.u32 256, 72
        %726 = vbcast.lane.b32.xlu0 %v688, %s725
        %v727 = vpop.permute.xlu0 %726
        %s729 = sor.u32 256, 80
        %730 = vbcast.lane.b32.xlu0 %v688, %s729
        %v731 = vpop.permute.xlu0 %730
        %s733 = sor.u32 256, 88
        %734 = vbcast.lane.b32.xlu0 %v688, %s733
        %v735 = vpop.permute.xlu0 %734
        %s737 = sor.u32 256, 96
        %738 = vbcast.lane.b32.xlu0 %v688, %s737
        %v739 = vpop.permute.xlu0 %738
        %s741 = sor.u32 256, 104
        %742 = vbcast.lane.b32.xlu0 %v688, %s741
        %v743 = vpop.permute.xlu0 %742
        %s745 = sor.u32 256, 112
        %746 = vbcast.lane.b32.xlu0 %v688, %s745
        %v747 = vpop.permute.xlu0 %746
        %s749 = sor.u32 256, 120
        %750 = vbcast.lane.b32.xlu0 %v688, %s749
        %v751 = vpop.permute.xlu0 %750
        %v752 = vlaneseq
        %v753 = vshrl.u32 %v752, 7
        %v754 = vsub.s32 1, %v753
        %v755 = vrot.slane %v615, %v754
        %757 = vbcast.lane.b32.xlu0 %v755, 256
        %v758 = vpop.permute.xlu0 %757
        %s760 = sor.u32 256, 8
        %761 = vbcast.lane.b32.xlu0 %v755, %s760
        %v762 = vpop.permute.xlu0 %761
        %s764 = sor.u32 256, 16
        %765 = vbcast.lane.b32.xlu0 %v755, %s764
        %v766 = vpop.permute.xlu0 %765
        %s768 = sor.u32 256, 24
        %769 = vbcast.lane.b32.xlu0 %v755, %s768
        %v770 = vpop.permute.xlu0 %769
        %s772 = sor.u32 256, 32
        %773 = vbcast.lane.b32.xlu0 %v755, %s772
        %v774 = vpop.permute.xlu0 %773
        %s776 = sor.u32 256, 40
        %777 = vbcast.lane.b32.xlu0 %v755, %s776
        %v778 = vpop.permute.xlu0 %777
        %s780 = sor.u32 256, 48
        %781 = vbcast.lane.b32.xlu0 %v755, %s780
        %v782 = vpop.permute.xlu0 %781
        %s784 = sor.u32 256, 56
        %785 = vbcast.lane.b32.xlu0 %v755, %s784
        %v786 = vpop.permute.xlu0 %785
        %s788 = sor.u32 256, 64
        %789 = vbcast.lane.b32.xlu0 %v755, %s788
        %v790 = vpop.permute.xlu0 %789
        %s792 = sor.u32 256, 72
        %793 = vbcast.lane.b32.xlu0 %v755, %s792
        %v794 = vpop.permute.xlu0 %793
        %s796 = sor.u32 256, 80
        %797 = vbcast.lane.b32.xlu0 %v755, %s796
        %v798 = vpop.permute.xlu0 %797
        %s800 = sor.u32 256, 88
        %801 = vbcast.lane.b32.xlu0 %v755, %s800
        %v802 = vpop.permute.xlu0 %801
        %s804 = sor.u32 256, 96
        %805 = vbcast.lane.b32.xlu0 %v755, %s804
        %v806 = vpop.permute.xlu0 %805
        %s808 = sor.u32 256, 104
        %809 = vbcast.lane.b32.xlu0 %v755, %s808
        %v810 = vpop.permute.xlu0 %809
        %s812 = sor.u32 256, 112
        %813 = vbcast.lane.b32.xlu0 %v755, %s812
        %v814 = vpop.permute.xlu0 %813
        %s816 = sor.u32 256, 120
        %817 = vbcast.lane.b32.xlu0 %v755, %s816
        %v818 = vpop.permute.xlu0 %817
        %v819 = vlaneseq
        %v820 = vshrl.u32 %v819, 7
        %v821 = vsub.s32 1, %v820
        %v822 = vrot.slane %v616, %v821
        %824 = vbcast.lane.b32.xlu0 %v822, 256
        %v825 = vpop.permute.xlu0 %824
        %s827 = sor.u32 256, 8
        %828 = vbcast.lane.b32.xlu0 %v822, %s827
        %v829 = vpop.permute.xlu0 %828
        %s831 = sor.u32 256, 16
        %832 = vbcast.lane.b32.xlu0 %v822, %s831
        %v833 = vpop.permute.xlu0 %832
        %s835 = sor.u32 256, 24
        %836 = vbcast.lane.b32.xlu0 %v822, %s835
        %v837 = vpop.permute.xlu0 %836
        %s839 = sor.u32 256, 32
        %840 = vbcast.lane.b32.xlu0 %v822, %s839
        %v841 = vpop.permute.xlu0 %840
        %s843 = sor.u32 256, 40
        %844 = vbcast.lane.b32.xlu0 %v822, %s843
        %v845 = vpop.permute.xlu0 %844
        %s847 = sor.u32 256, 48
        %848 = vbcast.lane.b32.xlu0 %v822, %s847
        %v849 = vpop.permute.xlu0 %848
        %s851 = sor.u32 256, 56
        %852 = vbcast.lane.b32.xlu0 %v822, %s851
        %v853 = vpop.permute.xlu0 %852
        %s855 = sor.u32 256, 64
        %856 = vbcast.lane.b32.xlu0 %v822, %s855
        %v857 = vpop.permute.xlu0 %856
        %s859 = sor.u32 256, 72
        %860 = vbcast.lane.b32.xlu0 %v822, %s859
        %v861 = vpop.permute.xlu0 %860
        %s863 = sor.u32 256, 80
        %864 = vbcast.lane.b32.xlu0 %v822, %s863
        %v865 = vpop.permute.xlu0 %864
        %s867 = sor.u32 256, 88
        %868 = vbcast.lane.b32.xlu0 %v822, %s867
        %v869 = vpop.permute.xlu0 %868
        %s871 = sor.u32 256, 96
        %872 = vbcast.lane.b32.xlu0 %v822, %s871
        %v873 = vpop.permute.xlu0 %872
        %s875 = sor.u32 256, 104
        %876 = vbcast.lane.b32.xlu0 %v822, %s875
        %v877 = vpop.permute.xlu0 %876
        %s879 = sor.u32 256, 112
        %880 = vbcast.lane.b32.xlu0 %v822, %s879
        %v881 = vpop.permute.xlu0 %880
        %s883 = sor.u32 256, 120
        %884 = vbcast.lane.b32.xlu0 %v822, %s883
        %v885 = vpop.permute.xlu0 %884
        %v886 = vlaneseq
        %v887 = vshrl.u32 %v886, 7
        %v888 = vsub.s32 2, %v887
        %v889 = vrot.slane %v615, %v888
        %891 = vbcast.lane.b32.xlu0 %v889, 256
        %v892 = vpop.permute.xlu0 %891
        %s894 = sor.u32 256, 8
        %895 = vbcast.lane.b32.xlu0 %v889, %s894
        %v896 = vpop.permute.xlu0 %895
        %s898 = sor.u32 256, 16
        %899 = vbcast.lane.b32.xlu0 %v889, %s898
        %v900 = vpop.permute.xlu0 %899
        %s902 = sor.u32 256, 24
        %903 = vbcast.lane.b32.xlu0 %v889, %s902
        %v904 = vpop.permute.xlu0 %903
        %s906 = sor.u32 256, 32
        %907 = vbcast.lane.b32.xlu0 %v889, %s906
        %v908 = vpop.permute.xlu0 %907
        %s910 = sor.u32 256, 40
        %911 = vbcast.lane.b32.xlu0 %v889, %s910
        %v912 = vpop.permute.xlu0 %911
        %s914 = sor.u32 256, 48
        %915 = vbcast.lane.b32.xlu0 %v889, %s914
        %v916 = vpop.permute.xlu0 %915
        %s918 = sor.u32 256, 56
        %919 = vbcast.lane.b32.xlu0 %v889, %s918
        %v920 = vpop.permute.xlu0 %919
        %s922 = sor.u32 256, 64
        %923 = vbcast.lane.b32.xlu0 %v889, %s922
        %v924 = vpop.permute.xlu0 %923
        %s926 = sor.u32 256, 72
        %927 = vbcast.lane.b32.xlu0 %v889, %s926
        %v928 = vpop.permute.xlu0 %927
        %s930 = sor.u32 256, 80
        %931 = vbcast.lane.b32.xlu0 %v889, %s930
        %v932 = vpop.permute.xlu0 %931
        %s934 = sor.u32 256, 88
        %935 = vbcast.lane.b32.xlu0 %v889, %s934
        %v936 = vpop.permute.xlu0 %935
        %s938 = sor.u32 256, 96
        %939 = vbcast.lane.b32.xlu0 %v889, %s938
        %v940 = vpop.permute.xlu0 %939
        %s942 = sor.u32 256, 104
        %943 = vbcast.lane.b32.xlu0 %v889, %s942
        %v944 = vpop.permute.xlu0 %943
        %s946 = sor.u32 256, 112
        %947 = vbcast.lane.b32.xlu0 %v889, %s946
        %v948 = vpop.permute.xlu0 %947
        %s950 = sor.u32 256, 120
        %951 = vbcast.lane.b32.xlu0 %v889, %s950
        %v952 = vpop.permute.xlu0 %951
        %v953 = vlaneseq
        %v954 = vshrl.u32 %v953, 7
        %v955 = vsub.s32 2, %v954
        %v956 = vrot.slane %v616, %v955
        %958 = vbcast.lane.b32.xlu0 %v956, 256
        %v959 = vpop.permute.xlu0 %958
        %s961 = sor.u32 256, 8
        %962 = vbcast.lane.b32.xlu0 %v956, %s961
        %v963 = vpop.permute.xlu0 %962
        %s965 = sor.u32 256, 16
        %966 = vbcast.lane.b32.xlu0 %v956, %s965
        %v967 = vpop.permute.xlu0 %966
        %s969 = sor.u32 256, 24
        %970 = vbcast.lane.b32.xlu0 %v956, %s969
        %v971 = vpop.permute.xlu0 %970
        %s973 = sor.u32 256, 32
        %974 = vbcast.lane.b32.xlu0 %v956, %s973
        %v975 = vpop.permute.xlu0 %974
        %s977 = sor.u32 256, 40
        %978 = vbcast.lane.b32.xlu0 %v956, %s977
        %v979 = vpop.permute.xlu0 %978
        %s981 = sor.u32 256, 48
        %982 = vbcast.lane.b32.xlu0 %v956, %s981
        %v983 = vpop.permute.xlu0 %982
        %s985 = sor.u32 256, 56
        %986 = vbcast.lane.b32.xlu0 %v956, %s985
        %v987 = vpop.permute.xlu0 %986
        %s989 = sor.u32 256, 64
        %990 = vbcast.lane.b32.xlu0 %v956, %s989
        %v991 = vpop.permute.xlu0 %990
        %s993 = sor.u32 256, 72
        %994 = vbcast.lane.b32.xlu0 %v956, %s993
        %v995 = vpop.permute.xlu0 %994
        %s997 = sor.u32 256, 80
        %998 = vbcast.lane.b32.xlu0 %v956, %s997
        %v999 = vpop.permute.xlu0 %998
        %s1001 = sor.u32 256, 88
        %1002 = vbcast.lane.b32.xlu0 %v956, %s1001
        %v1003 = vpop.permute.xlu0 %1002
        %s1005 = sor.u32 256, 96
        %1006 = vbcast.lane.b32.xlu0 %v956, %s1005
        %v1007 = vpop.permute.xlu0 %1006
        %s1009 = sor.u32 256, 104
        %1010 = vbcast.lane.b32.xlu0 %v956, %s1009
        %v1011 = vpop.permute.xlu0 %1010
        %s1013 = sor.u32 256, 112
        %1014 = vbcast.lane.b32.xlu0 %v956, %s1013
        %v1015 = vpop.permute.xlu0 %1014
        %s1017 = sor.u32 256, 120
        %1018 = vbcast.lane.b32.xlu0 %v956, %s1017
        %v1019 = vpop.permute.xlu0 %1018
        %v1020 = vlaneseq
        %v1021 = vshrl.u32 %v1020, 7
        %v1022 = vsub.s32 3, %v1021
        %v1023 = vrot.slane %v615, %v1022
        %1025 = vbcast.lane.b32.xlu0 %v1023, 256
        %v1026 = vpop.permute.xlu0 %1025
        %s1028 = sor.u32 256, 8
        %1029 = vbcast.lane.b32.xlu0 %v1023, %s1028
        %v1030 = vpop.permute.xlu0 %1029
        %s1032 = sor.u32 256, 16
        %1033 = vbcast.lane.b32.xlu0 %v1023, %s1032
        %v1034 = vpop.permute.xlu0 %1033
        %s1036 = sor.u32 256, 24
        %1037 = vbcast.lane.b32.xlu0 %v1023, %s1036
        %v1038 = vpop.permute.xlu0 %1037
        %s1040 = sor.u32 256, 32
        %1041 = vbcast.lane.b32.xlu0 %v1023, %s1040
        %v1042 = vpop.permute.xlu0 %1041
        %s1044 = sor.u32 256, 40
        %1045 = vbcast.lane.b32.xlu0 %v1023, %s1044
        %v1046 = vpop.permute.xlu0 %1045
        %s1048 = sor.u32 256, 48
        %1049 = vbcast.lane.b32.xlu0 %v1023, %s1048
        %v1050 = vpop.permute.xlu0 %1049
        %s1052 = sor.u32 256, 56
        %1053 = vbcast.lane.b32.xlu0 %v1023, %s1052
        %v1054 = vpop.permute.xlu0 %1053
        %s1056 = sor.u32 256, 64
        %1057 = vbcast.lane.b32.xlu0 %v1023, %s1056
        %v1058 = vpop.permute.xlu0 %1057
        %s1060 = sor.u32 256, 72
        %1061 = vbcast.lane.b32.xlu0 %v1023, %s1060
        %v1062 = vpop.permute.xlu0 %1061
        %s1064 = sor.u32 256, 80
        %1065 = vbcast.lane.b32.xlu0 %v1023, %s1064
        %v1066 = vpop.permute.xlu0 %1065
        %s1068 = sor.u32 256, 88
        %1069 = vbcast.lane.b32.xlu0 %v1023, %s1068
        %v1070 = vpop.permute.xlu0 %1069
        %s1072 = sor.u32 256, 96
        %1073 = vbcast.lane.b32.xlu0 %v1023, %s1072
        %v1074 = vpop.permute.xlu0 %1073
        %s1076 = sor.u32 256, 104
        %1077 = vbcast.lane.b32.xlu0 %v1023, %s1076
        %v1078 = vpop.permute.xlu0 %1077
        %s1080 = sor.u32 256, 112
        %1081 = vbcast.lane.b32.xlu0 %v1023, %s1080
        %v1082 = vpop.permute.xlu0 %1081
        %s1084 = sor.u32 256, 120
        %1085 = vbcast.lane.b32.xlu0 %v1023, %s1084
        %v1086 = vpop.permute.xlu0 %1085
        %v1087 = vlaneseq
        %v1088 = vshrl.u32 %v1087, 7
        %v1089 = vsub.s32 3, %v1088
        %v1090 = vrot.slane %v616, %v1089
        %1092 = vbcast.lane.b32.xlu0 %v1090, 256
        %v1093 = vpop.permute.xlu0 %1092
        %s1095 = sor.u32 256, 8
        %1096 = vbcast.lane.b32.xlu0 %v1090, %s1095
        %v1097 = vpop.permute.xlu0 %1096
        %s1099 = sor.u32 256, 16
        %1100 = vbcast.lane.b32.xlu0 %v1090, %s1099
        %v1101 = vpop.permute.xlu0 %1100
        %s1103 = sor.u32 256, 24
        %1104 = vbcast.lane.b32.xlu0 %v1090, %s1103
        %v1105 = vpop.permute.xlu0 %1104
        %s1107 = sor.u32 256, 32
        %1108 = vbcast.lane.b32.xlu0 %v1090, %s1107
        %v1109 = vpop.permute.xlu0 %1108
        %s1111 = sor.u32 256, 40
        %1112 = vbcast.lane.b32.xlu0 %v1090, %s1111
        %v1113 = vpop.permute.xlu0 %1112
        %s1115 = sor.u32 256, 48
        %1116 = vbcast.lane.b32.xlu0 %v1090, %s1115
        %v1117 = vpop.permute.xlu0 %1116
        %s1119 = sor.u32 256, 56
        %1120 = vbcast.lane.b32.xlu0 %v1090, %s1119
        %v1121 = vpop.permute.xlu0 %1120
        %s1123 = sor.u32 256, 64
        %1124 = vbcast.lane.b32.xlu0 %v1090, %s1123
        %v1125 = vpop.permute.xlu0 %1124
        %s1127 = sor.u32 256, 72
        %1128 = vbcast.lane.b32.xlu0 %v1090, %s1127
        %v1129 = vpop.permute.xlu0 %1128
        %s1131 = sor.u32 256, 80
        %1132 = vbcast.lane.b32.xlu0 %v1090, %s1131
        %v1133 = vpop.permute.xlu0 %1132
        %s1135 = sor.u32 256, 88
        %1136 = vbcast.lane.b32.xlu0 %v1090, %s1135
        %v1137 = vpop.permute.xlu0 %1136
        %s1139 = sor.u32 256, 96
        %1140 = vbcast.lane.b32.xlu0 %v1090, %s1139
        %v1141 = vpop.permute.xlu0 %1140
        %s1143 = sor.u32 256, 104
        %1144 = vbcast.lane.b32.xlu0 %v1090, %s1143
        %v1145 = vpop.permute.xlu0 %1144
        %s1147 = sor.u32 256, 112
        %1148 = vbcast.lane.b32.xlu0 %v1090, %s1147
        %v1149 = vpop.permute.xlu0 %1148
        %s1151 = sor.u32 256, 120
        %1152 = vbcast.lane.b32.xlu0 %v1090, %s1151
        %v1153 = vpop.permute.xlu0 %1152
        %v1154 = vlaneseq
        %v1155 = vshrl.u32 %v1154, 7
        %v1156 = vsub.s32 4, %v1155
        %v1157 = vrot.slane %v615, %v1156
        %1159 = vbcast.lane.b32.xlu0 %v1157, 256
        %v1160 = vpop.permute.xlu0 %1159
        %s1162 = sor.u32 256, 8
        %1163 = vbcast.lane.b32.xlu0 %v1157, %s1162
        %v1164 = vpop.permute.xlu0 %1163
        %s1166 = sor.u32 256, 16
        %1167 = vbcast.lane.b32.xlu0 %v1157, %s1166
        %v1168 = vpop.permute.xlu0 %1167
        %s1170 = sor.u32 256, 24
        %1171 = vbcast.lane.b32.xlu0 %v1157, %s1170
        %v1172 = vpop.permute.xlu0 %1171
        %s1174 = sor.u32 256, 32
        %1175 = vbcast.lane.b32.xlu0 %v1157, %s1174
        %v1176 = vpop.permute.xlu0 %1175
        %s1178 = sor.u32 256, 40
        %1179 = vbcast.lane.b32.xlu0 %v1157, %s1178
        %v1180 = vpop.permute.xlu0 %1179
        %s1182 = sor.u32 256, 48
        %1183 = vbcast.lane.b32.xlu0 %v1157, %s1182
        %v1184 = vpop.permute.xlu0 %1183
        %s1186 = sor.u32 256, 56
        %1187 = vbcast.lane.b32.xlu0 %v1157, %s1186
        %v1188 = vpop.permute.xlu0 %1187
        %s1190 = sor.u32 256, 64
        %1191 = vbcast.lane.b32.xlu0 %v1157, %s1190
        %v1192 = vpop.permute.xlu0 %1191
        %s1194 = sor.u32 256, 72
        %1195 = vbcast.lane.b32.xlu0 %v1157, %s1194
        %v1196 = vpop.permute.xlu0 %1195
        %s1198 = sor.u32 256, 80
        %1199 = vbcast.lane.b32.xlu0 %v1157, %s1198
        %v1200 = vpop.permute.xlu0 %1199
        %s1202 = sor.u32 256, 88
        %1203 = vbcast.lane.b32.xlu0 %v1157, %s1202
        %v1204 = vpop.permute.xlu0 %1203
        %s1206 = sor.u32 256, 96
        %1207 = vbcast.lane.b32.xlu0 %v1157, %s1206
        %v1208 = vpop.permute.xlu0 %1207
        %s1210 = sor.u32 256, 104
        %1211 = vbcast.lane.b32.xlu0 %v1157, %s1210
        %v1212 = vpop.permute.xlu0 %1211
        %s1214 = sor.u32 256, 112
        %1215 = vbcast.lane.b32.xlu0 %v1157, %s1214
        %v1216 = vpop.permute.xlu0 %1215
        %s1218 = sor.u32 256, 120
        %1219 = vbcast.lane.b32.xlu0 %v1157, %s1218
        %v1220 = vpop.permute.xlu0 %1219
        %v1221 = vlaneseq
        %v1222 = vshrl.u32 %v1221, 7
        %v1223 = vsub.s32 4, %v1222
        %v1224 = vrot.slane %v616, %v1223
        %1226 = vbcast.lane.b32.xlu0 %v1224, 256
        %v1227 = vpop.permute.xlu0 %1226
        %s1229 = sor.u32 256, 8
        %1230 = vbcast.lane.b32.xlu0 %v1224, %s1229
        %v1231 = vpop.permute.xlu0 %1230
        %s1233 = sor.u32 256, 16
        %1234 = vbcast.lane.b32.xlu0 %v1224, %s1233
        %v1235 = vpop.permute.xlu0 %1234
        %s1237 = sor.u32 256, 24
        %1238 = vbcast.lane.b32.xlu0 %v1224, %s1237
        %v1239 = vpop.permute.xlu0 %1238
        %s1241 = sor.u32 256, 32
        %1242 = vbcast.lane.b32.xlu0 %v1224, %s1241
        %v1243 = vpop.permute.xlu0 %1242
        %s1245 = sor.u32 256, 40
        %1246 = vbcast.lane.b32.xlu0 %v1224, %s1245
        %v1247 = vpop.permute.xlu0 %1246
        %s1249 = sor.u32 256, 48
        %1250 = vbcast.lane.b32.xlu0 %v1224, %s1249
        %v1251 = vpop.permute.xlu0 %1250
        %s1253 = sor.u32 256, 56
        %1254 = vbcast.lane.b32.xlu0 %v1224, %s1253
        %v1255 = vpop.permute.xlu0 %1254
        %s1257 = sor.u32 256, 64
        %1258 = vbcast.lane.b32.xlu0 %v1224, %s1257
        %v1259 = vpop.permute.xlu0 %1258
        %s1261 = sor.u32 256, 72
        %1262 = vbcast.lane.b32.xlu0 %v1224, %s1261
        %v1263 = vpop.permute.xlu0 %1262
        %s1265 = sor.u32 256, 80
        %1266 = vbcast.lane.b32.xlu0 %v1224, %s1265
        %v1267 = vpop.permute.xlu0 %1266
        %s1269 = sor.u32 256, 88
        %1270 = vbcast.lane.b32.xlu0 %v1224, %s1269
        %v1271 = vpop.permute.xlu0 %1270
        %s1273 = sor.u32 256, 96
        %1274 = vbcast.lane.b32.xlu0 %v1224, %s1273
        %v1275 = vpop.permute.xlu0 %1274
        %s1277 = sor.u32 256, 104
        %1278 = vbcast.lane.b32.xlu0 %v1224, %s1277
        %v1279 = vpop.permute.xlu0 %1278
        %s1281 = sor.u32 256, 112
        %1282 = vbcast.lane.b32.xlu0 %v1224, %s1281
        %v1283 = vpop.permute.xlu0 %1282
        %s1285 = sor.u32 256, 120
        %1286 = vbcast.lane.b32.xlu0 %v1224, %s1285
        %v1287 = vpop.permute.xlu0 %1286
        %v1288 = vlaneseq
        %v1289 = vshrl.u32 %v1288, 7
        %v1290 = vsub.s32 5, %v1289
        %v1291 = vrot.slane %v615, %v1290
        %1293 = vbcast.lane.b32.xlu0 %v1291, 256
        %v1294 = vpop.permute.xlu0 %1293
        %s1296 = sor.u32 256, 8
        %1297 = vbcast.lane.b32.xlu0 %v1291, %s1296
        %v1298 = vpop.permute.xlu0 %1297
        %s1300 = sor.u32 256, 16
        %1301 = vbcast.lane.b32.xlu0 %v1291, %s1300
        %v1302 = vpop.permute.xlu0 %1301
        %s1304 = sor.u32 256, 24
        %1305 = vbcast.lane.b32.xlu0 %v1291, %s1304
        %v1306 = vpop.permute.xlu0 %1305
        %s1308 = sor.u32 256, 32
        %1309 = vbcast.lane.b32.xlu0 %v1291, %s1308
        %v1310 = vpop.permute.xlu0 %1309
        %s1312 = sor.u32 256, 40
        %1313 = vbcast.lane.b32.xlu0 %v1291, %s1312
        %v1314 = vpop.permute.xlu0 %1313
        %s1316 = sor.u32 256, 48
        %1317 = vbcast.lane.b32.xlu0 %v1291, %s1316
        %v1318 = vpop.permute.xlu0 %1317
        %s1320 = sor.u32 256, 56
        %1321 = vbcast.lane.b32.xlu0 %v1291, %s1320
        %v1322 = vpop.permute.xlu0 %1321
        %s1324 = sor.u32 256, 64
        %1325 = vbcast.lane.b32.xlu0 %v1291, %s1324
        %v1326 = vpop.permute.xlu0 %1325
        %s1328 = sor.u32 256, 72
        %1329 = vbcast.lane.b32.xlu0 %v1291, %s1328
        %v1330 = vpop.permute.xlu0 %1329
        %s1332 = sor.u32 256, 80
        %1333 = vbcast.lane.b32.xlu0 %v1291, %s1332
        %v1334 = vpop.permute.xlu0 %1333
        %s1336 = sor.u32 256, 88
        %1337 = vbcast.lane.b32.xlu0 %v1291, %s1336
        %v1338 = vpop.permute.xlu0 %1337
        %s1340 = sor.u32 256, 96
        %1341 = vbcast.lane.b32.xlu0 %v1291, %s1340
        %v1342 = vpop.permute.xlu0 %1341
        %s1344 = sor.u32 256, 104
        %1345 = vbcast.lane.b32.xlu0 %v1291, %s1344
        %v1346 = vpop.permute.xlu0 %1345
        %s1348 = sor.u32 256, 112
        %1349 = vbcast.lane.b32.xlu0 %v1291, %s1348
        %v1350 = vpop.permute.xlu0 %1349
        %s1352 = sor.u32 256, 120
        %1353 = vbcast.lane.b32.xlu0 %v1291, %s1352
        %v1354 = vpop.permute.xlu0 %1353
        %v1355 = vlaneseq
        %v1356 = vshrl.u32 %v1355, 7
        %v1357 = vsub.s32 5, %v1356
        %v1358 = vrot.slane %v616, %v1357
        %1360 = vbcast.lane.b32.xlu0 %v1358, 256
        %v1361 = vpop.permute.xlu0 %1360
        %s1363 = sor.u32 256, 8
        %1364 = vbcast.lane.b32.xlu0 %v1358, %s1363
        %v1365 = vpop.permute.xlu0 %1364
        %s1367 = sor.u32 256, 16
        %1368 = vbcast.lane.b32.xlu0 %v1358, %s1367
        %v1369 = vpop.permute.xlu0 %1368
        %s1371 = sor.u32 256, 24
        %1372 = vbcast.lane.b32.xlu0 %v1358, %s1371
        %v1373 = vpop.permute.xlu0 %1372
        %s1375 = sor.u32 256, 32
        %1376 = vbcast.lane.b32.xlu0 %v1358, %s1375
        %v1377 = vpop.permute.xlu0 %1376
        %s1379 = sor.u32 256, 40
        %1380 = vbcast.lane.b32.xlu0 %v1358, %s1379
        %v1381 = vpop.permute.xlu0 %1380
        %s1383 = sor.u32 256, 48
        %1384 = vbcast.lane.b32.xlu0 %v1358, %s1383
        %v1385 = vpop.permute.xlu0 %1384
        %s1387 = sor.u32 256, 56
        %1388 = vbcast.lane.b32.xlu0 %v1358, %s1387
        %v1389 = vpop.permute.xlu0 %1388
        %s1391 = sor.u32 256, 64
        %1392 = vbcast.lane.b32.xlu0 %v1358, %s1391
        %v1393 = vpop.permute.xlu0 %1392
        %s1395 = sor.u32 256, 72
        %1396 = vbcast.lane.b32.xlu0 %v1358, %s1395
        %v1397 = vpop.permute.xlu0 %1396
        %s1399 = sor.u32 256, 80
        %1400 = vbcast.lane.b32.xlu0 %v1358, %s1399
        %v1401 = vpop.permute.xlu0 %1400
        %s1403 = sor.u32 256, 88
        %1404 = vbcast.lane.b32.xlu0 %v1358, %s1403
        %v1405 = vpop.permute.xlu0 %1404
        %s1407 = sor.u32 256, 96
        %1408 = vbcast.lane.b32.xlu0 %v1358, %s1407
        %v1409 = vpop.permute.xlu0 %1408
        %s1411 = sor.u32 256, 104
        %1412 = vbcast.lane.b32.xlu0 %v1358, %s1411
        %v1413 = vpop.permute.xlu0 %1412
        %s1415 = sor.u32 256, 112
        %1416 = vbcast.lane.b32.xlu0 %v1358, %s1415
        %v1417 = vpop.permute.xlu0 %1416
        %s1419 = sor.u32 256, 120
        %1420 = vbcast.lane.b32.xlu0 %v1358, %s1419
        %v1421 = vpop.permute.xlu0 %1420
        %v1422 = vlaneseq
        %v1423 = vshrl.u32 %v1422, 7
        %v1424 = vsub.s32 6, %v1423
        %v1425 = vrot.slane %v615, %v1424
        %1427 = vbcast.lane.b32.xlu0 %v1425, 256
        %v1428 = vpop.permute.xlu0 %1427
        %s1430 = sor.u32 256, 8
        %1431 = vbcast.lane.b32.xlu0 %v1425, %s1430
        %v1432 = vpop.permute.xlu0 %1431
        %s1434 = sor.u32 256, 16
        %1435 = vbcast.lane.b32.xlu0 %v1425, %s1434
        %v1436 = vpop.permute.xlu0 %1435
        %s1438 = sor.u32 256, 24
        %1439 = vbcast.lane.b32.xlu0 %v1425, %s1438
        %v1440 = vpop.permute.xlu0 %1439
        %s1442 = sor.u32 256, 32
        %1443 = vbcast.lane.b32.xlu0 %v1425, %s1442
        %v1444 = vpop.permute.xlu0 %1443
        %s1446 = sor.u32 256, 40
        %1447 = vbcast.lane.b32.xlu0 %v1425, %s1446
        %v1448 = vpop.permute.xlu0 %1447
        %s1450 = sor.u32 256, 48
        %1451 = vbcast.lane.b32.xlu0 %v1425, %s1450
        %v1452 = vpop.permute.xlu0 %1451
        %s1454 = sor.u32 256, 56
        %1455 = vbcast.lane.b32.xlu0 %v1425, %s1454
        %v1456 = vpop.permute.xlu0 %1455
        %s1458 = sor.u32 256, 64
        %1459 = vbcast.lane.b32.xlu0 %v1425, %s1458
        %v1460 = vpop.permute.xlu0 %1459
        %s1462 = sor.u32 256, 72
        %1463 = vbcast.lane.b32.xlu0 %v1425, %s1462
        %v1464 = vpop.permute.xlu0 %1463
        %s1466 = sor.u32 256, 80
        %1467 = vbcast.lane.b32.xlu0 %v1425, %s1466
        %v1468 = vpop.permute.xlu0 %1467
        %s1470 = sor.u32 256, 88
        %1471 = vbcast.lane.b32.xlu0 %v1425, %s1470
        %v1472 = vpop.permute.xlu0 %1471
        %s1474 = sor.u32 256, 96
        %1475 = vbcast.lane.b32.xlu0 %v1425, %s1474
        %v1476 = vpop.permute.xlu0 %1475
        %s1478 = sor.u32 256, 104
        %1479 = vbcast.lane.b32.xlu0 %v1425, %s1478
        %v1480 = vpop.permute.xlu0 %1479
        %s1482 = sor.u32 256, 112
        %1483 = vbcast.lane.b32.xlu0 %v1425, %s1482
        %v1484 = vpop.permute.xlu0 %1483
        %s1486 = sor.u32 256, 120
        %1487 = vbcast.lane.b32.xlu0 %v1425, %s1486
        %v1488 = vpop.permute.xlu0 %1487
        %v1489 = vlaneseq
        %v1490 = vshrl.u32 %v1489, 7
        %v1491 = vsub.s32 6, %v1490
        %v1492 = vrot.slane %v616, %v1491
        %1494 = vbcast.lane.b32.xlu0 %v1492, 256
        %v1495 = vpop.permute.xlu0 %1494
        %s1497 = sor.u32 256, 8
        %1498 = vbcast.lane.b32.xlu0 %v1492, %s1497
        %v1499 = vpop.permute.xlu0 %1498
        %s1501 = sor.u32 256, 16
        %1502 = vbcast.lane.b32.xlu0 %v1492, %s1501
        %v1503 = vpop.permute.xlu0 %1502
        %s1505 = sor.u32 256, 24
        %1506 = vbcast.lane.b32.xlu0 %v1492, %s1505
        %v1507 = vpop.permute.xlu0 %1506
        %s1509 = sor.u32 256, 32
        %1510 = vbcast.lane.b32.xlu0 %v1492, %s1509
        %v1511 = vpop.permute.xlu0 %1510
        %s1513 = sor.u32 256, 40
        %1514 = vbcast.lane.b32.xlu0 %v1492, %s1513
        %v1515 = vpop.permute.xlu0 %1514
        %s1517 = sor.u32 256, 48
        %1518 = vbcast.lane.b32.xlu0 %v1492, %s1517
        %v1519 = vpop.permute.xlu0 %1518
        %s1521 = sor.u32 256, 56
        %1522 = vbcast.lane.b32.xlu0 %v1492, %s1521
        %v1523 = vpop.permute.xlu0 %1522
        %s1525 = sor.u32 256, 64
        %1526 = vbcast.lane.b32.xlu0 %v1492, %s1525
        %v1527 = vpop.permute.xlu0 %1526
        %s1529 = sor.u32 256, 72
        %1530 = vbcast.lane.b32.xlu0 %v1492, %s1529
        %v1531 = vpop.permute.xlu0 %1530
        %s1533 = sor.u32 256, 80
        %1534 = vbcast.lane.b32.xlu0 %v1492, %s1533
        %v1535 = vpop.permute.xlu0 %1534
        %s1537 = sor.u32 256, 88
        %1538 = vbcast.lane.b32.xlu0 %v1492, %s1537
        %v1539 = vpop.permute.xlu0 %1538
        %s1541 = sor.u32 256, 96
        %1542 = vbcast.lane.b32.xlu0 %v1492, %s1541
        %v1543 = vpop.permute.xlu0 %1542
        %s1545 = sor.u32 256, 104
        %1546 = vbcast.lane.b32.xlu0 %v1492, %s1545
        %v1547 = vpop.permute.xlu0 %1546
        %s1549 = sor.u32 256, 112
        %1550 = vbcast.lane.b32.xlu0 %v1492, %s1549
        %v1551 = vpop.permute.xlu0 %1550
        %s1553 = sor.u32 256, 120
        %1554 = vbcast.lane.b32.xlu0 %v1492, %s1553
        %v1555 = vpop.permute.xlu0 %1554
        %v1556 = vlaneseq
        %v1557 = vshrl.u32 %v1556, 7
        %v1558 = vsub.s32 7, %v1557
        %v1559 = vrot.slane %v615, %v1558
        %1561 = vbcast.lane.b32.xlu0 %v1559, 256
        %v1562 = vpop.permute.xlu0 %1561
        %s1564 = sor.u32 256, 8
        %1565 = vbcast.lane.b32.xlu0 %v1559, %s1564
        %v1566 = vpop.permute.xlu0 %1565
        %s1568 = sor.u32 256, 16
        %1569 = vbcast.lane.b32.xlu0 %v1559, %s1568
        %v1570 = vpop.permute.xlu0 %1569
        %s1572 = sor.u32 256, 24
        %1573 = vbcast.lane.b32.xlu0 %v1559, %s1572
        %v1574 = vpop.permute.xlu0 %1573
        %s1576 = sor.u32 256, 32
        %1577 = vbcast.lane.b32.xlu0 %v1559, %s1576
        %v1578 = vpop.permute.xlu0 %1577
        %s1580 = sor.u32 256, 40
        %1581 = vbcast.lane.b32.xlu0 %v1559, %s1580
        %v1582 = vpop.permute.xlu0 %1581
        %s1584 = sor.u32 256, 48
        %1585 = vbcast.lane.b32.xlu0 %v1559, %s1584
        %v1586 = vpop.permute.xlu0 %1585
        %s1588 = sor.u32 256, 56
        %1589 = vbcast.lane.b32.xlu0 %v1559, %s1588
        %v1590 = vpop.permute.xlu0 %1589
        %s1592 = sor.u32 256, 64
        %1593 = vbcast.lane.b32.xlu0 %v1559, %s1592
        %v1594 = vpop.permute.xlu0 %1593
        %s1596 = sor.u32 256, 72
        %1597 = vbcast.lane.b32.xlu0 %v1559, %s1596
        %v1598 = vpop.permute.xlu0 %1597
        %s1600 = sor.u32 256, 80
        %1601 = vbcast.lane.b32.xlu0 %v1559, %s1600
        %v1602 = vpop.permute.xlu0 %1601
        %s1604 = sor.u32 256, 88
        %1605 = vbcast.lane.b32.xlu0 %v1559, %s1604
        %v1606 = vpop.permute.xlu0 %1605
        %s1608 = sor.u32 256, 96
        %1609 = vbcast.lane.b32.xlu0 %v1559, %s1608
        %v1610 = vpop.permute.xlu0 %1609
        %s1612 = sor.u32 256, 104
        %1613 = vbcast.lane.b32.xlu0 %v1559, %s1612
        %v1614 = vpop.permute.xlu0 %1613
        %s1616 = sor.u32 256, 112
        %1617 = vbcast.lane.b32.xlu0 %v1559, %s1616
        %v1618 = vpop.permute.xlu0 %1617
        %s1620 = sor.u32 256, 120
        %1621 = vbcast.lane.b32.xlu0 %v1559, %s1620
        %v1622 = vpop.permute.xlu0 %1621
        %v1623 = vlaneseq
        %v1624 = vshrl.u32 %v1623, 7
        %v1625 = vsub.s32 7, %v1624
        %v1626 = vrot.slane %v616, %v1625
        %1628 = vbcast.lane.b32.xlu0 %v1626, 256
        %v1629 = vpop.permute.xlu0 %1628
        %s1631 = sor.u32 256, 8
        %1632 = vbcast.lane.b32.xlu0 %v1626, %s1631
        %v1633 = vpop.permute.xlu0 %1632
        %s1635 = sor.u32 256, 16
        %1636 = vbcast.lane.b32.xlu0 %v1626, %s1635
        %v1637 = vpop.permute.xlu0 %1636
        %s1639 = sor.u32 256, 24
        %1640 = vbcast.lane.b32.xlu0 %v1626, %s1639
        %v1641 = vpop.permute.xlu0 %1640
        %s1643 = sor.u32 256, 32
        %1644 = vbcast.lane.b32.xlu0 %v1626, %s1643
        %v1645 = vpop.permute.xlu0 %1644
        %s1647 = sor.u32 256, 40
        %1648 = vbcast.lane.b32.xlu0 %v1626, %s1647
        %v1649 = vpop.permute.xlu0 %1648
        %s1651 = sor.u32 256, 48
        %1652 = vbcast.lane.b32.xlu0 %v1626, %s1651
        %v1653 = vpop.permute.xlu0 %1652
        %s1655 = sor.u32 256, 56
        %1656 = vbcast.lane.b32.xlu0 %v1626, %s1655
        %v1657 = vpop.permute.xlu0 %1656
        %s1659 = sor.u32 256, 64
        %1660 = vbcast.lane.b32.xlu0 %v1626, %s1659
        %v1661 = vpop.permute.xlu0 %1660
        %s1663 = sor.u32 256, 72
        %1664 = vbcast.lane.b32.xlu0 %v1626, %s1663
        %v1665 = vpop.permute.xlu0 %1664
        %s1667 = sor.u32 256, 80
        %1668 = vbcast.lane.b32.xlu0 %v1626, %s1667
        %v1669 = vpop.permute.xlu0 %1668
        %s1671 = sor.u32 256, 88
        %1672 = vbcast.lane.b32.xlu0 %v1626, %s1671
        %v1673 = vpop.permute.xlu0 %1672
        %s1675 = sor.u32 256, 96
        %1676 = vbcast.lane.b32.xlu0 %v1626, %s1675
        %v1677 = vpop.permute.xlu0 %1676
        %s1679 = sor.u32 256, 104
        %1680 = vbcast.lane.b32.xlu0 %v1626, %s1679
        %v1681 = vpop.permute.xlu0 %1680
        %s1683 = sor.u32 256, 112
        %1684 = vbcast.lane.b32.xlu0 %v1626, %s1683
        %v1685 = vpop.permute.xlu0 %1684
        %s1687 = sor.u32 256, 120
        %1688 = vbcast.lane.b32.xlu0 %v1626, %s1687
        %v1689 = vpop.permute.xlu0 %1688
        %v1690 = vmul.f32 %v359, %v624
        %v1691 = vmul.f32 %v360, %v628
        %v1692 = vmul.f32 %v361, %v632
        %v1693 = vmul.f32 %v362, %v636
        %v1694 = vmul.f32 %v363, %v640
        %v1695 = vmul.f32 %v364, %v644
        %v1696 = vmul.f32 %v365, %v648
        %v1697 = vmul.f32 %v366, %v652
        %v1698 = vmul.f32 %v367, %v656
        %v1699 = vmul.f32 %v368, %v660
        %v1700 = vmul.f32 %v369, %v664
        %v1701 = vmul.f32 %v370, %v668
        %v1702 = vmul.f32 %v371, %v672
        %v1703 = vmul.f32 %v372, %v676
        %v1704 = vmul.f32 %v373, %v680
        %v1705 = vmul.f32 %v374, %v684
        %v1706 = vmul.f32 %v375, %v691
        %v1707 = vmul.f32 %v376, %v695
        %v1708 = vmul.f32 %v377, %v699
        %v1709 = vmul.f32 %v378, %v703
        %v1710 = vmul.f32 %v379, %v707
        %v1711 = vmul.f32 %v380, %v711
        %v1712 = vmul.f32 %v381, %v715
        %v1713 = vmul.f32 %v382, %v719
        %v1714 = vmul.f32 %v383, %v723
        %v1715 = vmul.f32 %v384, %v727
        %v1716 = vmul.f32 %v385, %v731
        %v1717 = vmul.f32 %v386, %v735
        %v1718 = vmul.f32 %v387, %v739
        %v1719 = vmul.f32 %v388, %v743
        %v1720 = vmul.f32 %v389, %v747
        %v1721 = vmul.f32 %v390, %v751
        %v1722 = vmul.f32 %v391, %v758
        %v1723 = vmul.f32 %v392, %v762
        %v1724 = vmul.f32 %v393, %v766
        %v1725 = vmul.f32 %v394, %v770
        %v1726 = vmul.f32 %v395, %v774
        %v1727 = vmul.f32 %v396, %v778
        %v1728 = vmul.f32 %v397, %v782
        %v1729 = vmul.f32 %v398, %v786
        %v1730 = vmul.f32 %v399, %v790
        %v1731 = vmul.f32 %v400, %v794
        %v1732 = vmul.f32 %v401, %v798
        %v1733 = vmul.f32 %v402, %v802
        %v1734 = vmul.f32 %v403, %v806
        %v1735 = vmul.f32 %v404, %v810
        %v1736 = vmul.f32 %v405, %v814
        %v1737 = vmul.f32 %v406, %v818
        %v1738 = vmul.f32 %v407, %v825
        %v1739 = vmul.f32 %v408, %v829
        %v1740 = vmul.f32 %v409, %v833
        %v1741 = vmul.f32 %v410, %v837
        %v1742 = vmul.f32 %v411, %v841
        %v1743 = vmul.f32 %v412, %v845
        %v1744 = vmul.f32 %v413, %v849
        %v1745 = vmul.f32 %v414, %v853
        %v1746 = vmul.f32 %v415, %v857
        %v1747 = vmul.f32 %v416, %v861
        %v1748 = vmul.f32 %v417, %v865
        %v1749 = vmul.f32 %v418, %v869
        %v1750 = vmul.f32 %v419, %v873
        %v1751 = vmul.f32 %v420, %v877
        %v1752 = vmul.f32 %v421, %v881
        %v1753 = vmul.f32 %v422, %v885
        %v1754 = vmul.f32 %v423, %v892
        %v1755 = vmul.f32 %v424, %v896
        %v1756 = vmul.f32 %v425, %v900
        %v1757 = vmul.f32 %v426, %v904
        %v1758 = vmul.f32 %v427, %v908
        %v1759 = vmul.f32 %v428, %v912
        %v1760 = vmul.f32 %v429, %v916
        %v1761 = vmul.f32 %v430, %v920
        %v1762 = vmul.f32 %v431, %v924
        %v1763 = vmul.f32 %v432, %v928
        %v1764 = vmul.f32 %v433, %v932
        %v1765 = vmul.f32 %v434, %v936
        %v1766 = vmul.f32 %v435, %v940
        %v1767 = vmul.f32 %v436, %v944
        %v1768 = vmul.f32 %v437, %v948
        %v1769 = vmul.f32 %v438, %v952
        %v1770 = vmul.f32 %v439, %v959
        %v1771 = vmul.f32 %v440, %v963
        %v1772 = vmul.f32 %v441, %v967
        %v1773 = vmul.f32 %v442, %v971
        %v1774 = vmul.f32 %v443, %v975
        %v1775 = vmul.f32 %v444, %v979
        %v1776 = vmul.f32 %v445, %v983
        %v1777 = vmul.f32 %v446, %v987
        %v1778 = vmul.f32 %v447, %v991
        %v1779 = vmul.f32 %v448, %v995
        %v1780 = vmul.f32 %v449, %v999
        %v1781 = vmul.f32 %v450, %v1003
        %v1782 = vmul.f32 %v451, %v1007
        %v1783 = vmul.f32 %v452, %v1011
        %v1784 = vmul.f32 %v453, %v1015
        %v1785 = vmul.f32 %v454, %v1019
        %v1786 = vmul.f32 %v455, %v1026
        %v1787 = vmul.f32 %v456, %v1030
        %v1788 = vmul.f32 %v457, %v1034
        %v1789 = vmul.f32 %v458, %v1038
        %v1790 = vmul.f32 %v459, %v1042
        %v1791 = vmul.f32 %v460, %v1046
        %v1792 = vmul.f32 %v461, %v1050
        %v1793 = vmul.f32 %v462, %v1054
        %v1794 = vmul.f32 %v463, %v1058
        %v1795 = vmul.f32 %v464, %v1062
        %v1796 = vmul.f32 %v465, %v1066
        %v1797 = vmul.f32 %v466, %v1070
        %v1798 = vmul.f32 %v467, %v1074
        %v1799 = vmul.f32 %v468, %v1078
        %v1800 = vmul.f32 %v469, %v1082
        %v1801 = vmul.f32 %v470, %v1086
        %v1802 = vmul.f32 %v471, %v1093
        %v1803 = vmul.f32 %v472, %v1097
        %v1804 = vmul.f32 %v473, %v1101
        %v1805 = vmul.f32 %v474, %v1105
        %v1806 = vmul.f32 %v475, %v1109
        %v1807 = vmul.f32 %v476, %v1113
        %v1808 = vmul.f32 %v477, %v1117
        %v1809 = vmul.f32 %v478, %v1121
        %v1810 = vmul.f32 %v479, %v1125
        %v1811 = vmul.f32 %v480, %v1129
        %v1812 = vmul.f32 %v481, %v1133
        %v1813 = vmul.f32 %v482, %v1137
        %v1814 = vmul.f32 %v483, %v1141
        %v1815 = vmul.f32 %v484, %v1145
        %v1816 = vmul.f32 %v485, %v1149
        %v1817 = vmul.f32 %v486, %v1153
        %v1818 = vmul.f32 %v487, %v1160
        %v1819 = vmul.f32 %v488, %v1164
        %v1820 = vmul.f32 %v489, %v1168
        %v1821 = vmul.f32 %v490, %v1172
        %v1822 = vmul.f32 %v491, %v1176
        %v1823 = vmul.f32 %v492, %v1180
        %v1824 = vmul.f32 %v493, %v1184
        %v1825 = vmul.f32 %v494, %v1188
        %v1826 = vmul.f32 %v495, %v1192
        %v1827 = vmul.f32 %v496, %v1196
        %v1828 = vmul.f32 %v497, %v1200
        %v1829 = vmul.f32 %v498, %v1204
        %v1830 = vmul.f32 %v499, %v1208
        %v1831 = vmul.f32 %v500, %v1212
        %v1832 = vmul.f32 %v501, %v1216
        %v1833 = vmul.f32 %v502, %v1220
        %v1834 = vmul.f32 %v503, %v1227
        %v1835 = vmul.f32 %v504, %v1231
        %v1836 = vmul.f32 %v505, %v1235
        %v1837 = vmul.f32 %v506, %v1239
        %v1838 = vmul.f32 %v507, %v1243
        %v1839 = vmul.f32 %v508, %v1247
        %v1840 = vmul.f32 %v509, %v1251
        %v1841 = vmul.f32 %v510, %v1255
        %v1842 = vmul.f32 %v511, %v1259
        %v1843 = vmul.f32 %v512, %v1263
        %v1844 = vmul.f32 %v513, %v1267
        %v1845 = vmul.f32 %v514, %v1271
        %v1846 = vmul.f32 %v515, %v1275
        %v1847 = vmul.f32 %v516, %v1279
        %v1848 = vmul.f32 %v517, %v1283
        %v1849 = vmul.f32 %v518, %v1287
        %v1850 = vmul.f32 %v519, %v1294
        %v1851 = vmul.f32 %v520, %v1298
        %v1852 = vmul.f32 %v521, %v1302
        %v1853 = vmul.f32 %v522, %v1306
        %v1854 = vmul.f32 %v523, %v1310
        %v1855 = vmul.f32 %v524, %v1314
        %v1856 = vmul.f32 %v525, %v1318
        %v1857 = vmul.f32 %v526, %v1322
        %v1858 = vmul.f32 %v527, %v1326
        %v1859 = vmul.f32 %v528, %v1330
        %v1860 = vmul.f32 %v529, %v1334
        %v1861 = vmul.f32 %v530, %v1338
        %v1862 = vmul.f32 %v531, %v1342
        %v1863 = vmul.f32 %v532, %v1346
        %v1864 = vmul.f32 %v533, %v1350
        %v1865 = vmul.f32 %v534, %v1354
        %v1866 = vmul.f32 %v535, %v1361
        %v1867 = vmul.f32 %v536, %v1365
        %v1868 = vmul.f32 %v537, %v1369
        %v1869 = vmul.f32 %v538, %v1373
        %v1870 = vmul.f32 %v539, %v1377
        %v1871 = vmul.f32 %v540, %v1381
        %v1872 = vmul.f32 %v541, %v1385
        %v1873 = vmul.f32 %v542, %v1389
        %v1874 = vmul.f32 %v543, %v1393
        %v1875 = vmul.f32 %v544, %v1397
        %v1876 = vmul.f32 %v545, %v1401
        %v1877 = vmul.f32 %v546, %v1405
        %v1878 = vmul.f32 %v547, %v1409
        %v1879 = vmul.f32 %v548, %v1413
        %v1880 = vmul.f32 %v549, %v1417
        %v1881 = vmul.f32 %v550, %v1421
        %v1882 = vmul.f32 %v551, %v1428
        %v1883 = vmul.f32 %v552, %v1432
        %v1884 = vmul.f32 %v553, %v1436
        %v1885 = vmul.f32 %v554, %v1440
        %v1886 = vmul.f32 %v555, %v1444
        %v1887 = vmul.f32 %v556, %v1448
        %v1888 = vmul.f32 %v557, %v1452
        %v1889 = vmul.f32 %v558, %v1456
        %v1890 = vmul.f32 %v559, %v1460
        %v1891 = vmul.f32 %v560, %v1464
        %v1892 = vmul.f32 %v561, %v1468
        %v1893 = vmul.f32 %v562, %v1472
        %v1894 = vmul.f32 %v563, %v1476
        %v1895 = vmul.f32 %v564, %v1480
        %v1896 = vmul.f32 %v565, %v1484
        %v1897 = vmul.f32 %v566, %v1488
        %v1898 = vmul.f32 %v567, %v1495
        %v1899 = vmul.f32 %v568, %v1499
        %v1900 = vmul.f32 %v569, %v1503
        %v1901 = vmul.f32 %v570, %v1507
        %v1902 = vmul.f32 %v571, %v1511
        %v1903 = vmul.f32 %v572, %v1515
        %v1904 = vmul.f32 %v573, %v1519
        %v1905 = vmul.f32 %v574, %v1523
        %v1906 = vmul.f32 %v575, %v1527
        %v1907 = vmul.f32 %v576, %v1531
        %v1908 = vmul.f32 %v577, %v1535
        %v1909 = vmul.f32 %v578, %v1539
        %v1910 = vmul.f32 %v579, %v1543
        %v1911 = vmul.f32 %v580, %v1547
        %v1912 = vmul.f32 %v581, %v1551
        %v1913 = vmul.f32 %v582, %v1555
        %v1914 = vmul.f32 %v583, %v1562
        %v1915 = vmul.f32 %v584, %v1566
        %v1916 = vmul.f32 %v585, %v1570
        %v1917 = vmul.f32 %v586, %v1574
        %v1918 = vmul.f32 %v587, %v1578
        %v1919 = vmul.f32 %v588, %v1582
        %v1920 = vmul.f32 %v589, %v1586
        %v1921 = vmul.f32 %v590, %v1590
        %v1922 = vmul.f32 %v591, %v1594
        %v1923 = vmul.f32 %v592, %v1598
        %v1924 = vmul.f32 %v593, %v1602
        %v1925 = vmul.f32 %v594, %v1606
        %v1926 = vmul.f32 %v595, %v1610
        %v1927 = vmul.f32 %v596, %v1614
        %v1928 = vmul.f32 %v597, %v1618
        %v1929 = vmul.f32 %v598, %v1622
        %v1930 = vmul.f32 %v599, %v1629
        %v1931 = vmul.f32 %v600, %v1633
        %v1932 = vmul.f32 %v601, %v1637
        %v1933 = vmul.f32 %v602, %v1641
        %v1934 = vmul.f32 %v603, %v1645
        %v1935 = vmul.f32 %v604, %v1649
        %v1936 = vmul.f32 %v605, %v1653
        %v1937 = vmul.f32 %v606, %v1657
        %v1938 = vmul.f32 %v607, %v1661
        %v1939 = vmul.f32 %v608, %v1665
        %v1940 = vmul.f32 %v609, %v1669
        %v1941 = vmul.f32 %v610, %v1673
        %v1942 = vmul.f32 %v611, %v1677
        %v1943 = vmul.f32 %v612, %v1681
        %v1944 = vmul.f32 %v613, %v1685
        %v1945 = vmul.f32 %v614, %v1689
        %v1946 = vadd.f32 %v1690, %v1691
        %v1947 = vadd.f32 %v1946, %v1692
        %v1948 = vadd.f32 %v1947, %v1693
        %v1949 = vadd.f32 %v1948, %v1694
        %v1950 = vadd.f32 %v1949, %v1695
        %v1951 = vadd.f32 %v1950, %v1696
        %v1952 = vadd.f32 %v1951, %v1697
        %v1953 = vadd.f32 %v1952, %v1698
        %v1954 = vadd.f32 %v1953, %v1699
        %v1955 = vadd.f32 %v1954, %v1700
        %v1956 = vadd.f32 %v1955, %v1701
        %v1957 = vadd.f32 %v1956, %v1702
        %v1958 = vadd.f32 %v1957, %v1703
        %v1959 = vadd.f32 %v1958, %v1704
        %v1960 = vadd.f32 %v1959, %v1705
        %v1961 = vadd.f32 %v1960, %v1706
        %v1962 = vadd.f32 %v1961, %v1707
        %v1963 = vadd.f32 %v1962, %v1708
        %v1964 = vadd.f32 %v1963, %v1709
        %v1965 = vadd.f32 %v1964, %v1710
        %v1966 = vadd.f32 %v1965, %v1711
        %v1967 = vadd.f32 %v1966, %v1712
        %v1968 = vadd.f32 %v1967, %v1713
        %v1969 = vadd.f32 %v1968, %v1714
        %v1970 = vadd.f32 %v1969, %v1715
        %v1971 = vadd.f32 %v1970, %v1716
        %v1972 = vadd.f32 %v1971, %v1717
        %v1973 = vadd.f32 %v1972, %v1718
        %v1974 = vadd.f32 %v1973, %v1719
        %v1975 = vadd.f32 %v1974, %v1720
        %v1976 = vadd.f32 %v1975, %v1721
        %v1977 = vrot.slane %v1976, 4
        %v1978 = vadd.f32 %v1976, %v1977
        %v1979 = vrot.slane %v1978, 2
        %v1980 = vadd.f32 %v1978, %v1979
        %v1981 = vrot.slane %v1980, 1
        %v1982 = vadd.f32 %v1980, %v1981
        %v1983 = vadd.f32 %v1722, %v1723
        %v1984 = vadd.f32 %v1983, %v1724
        %v1985 = vadd.f32 %v1984, %v1725
        %v1986 = vadd.f32 %v1985, %v1726
        %v1987 = vadd.f32 %v1986, %v1727
        %v1988 = vadd.f32 %v1987, %v1728
        %v1989 = vadd.f32 %v1988, %v1729
        %v1990 = vadd.f32 %v1989, %v1730
        %v1991 = vadd.f32 %v1990, %v1731
        %v1992 = vadd.f32 %v1991, %v1732
        %v1993 = vadd.f32 %v1992, %v1733
        %v1994 = vadd.f32 %v1993, %v1734
        %v1995 = vadd.f32 %v1994, %v1735
        %v1996 = vadd.f32 %v1995, %v1736
        %v1997 = vadd.f32 %v1996, %v1737
        %v1998 = vadd.f32 %v1997, %v1738
        %v1999 = vadd.f32 %v1998, %v1739
        %v2000 = vadd.f32 %v1999, %v1740
        %v2001 = vadd.f32 %v2000, %v1741
        %v2002 = vadd.f32 %v2001, %v1742
        %v2003 = vadd.f32 %v2002, %v1743
        %v2004 = vadd.f32 %v2003, %v1744
        %v2005 = vadd.f32 %v2004, %v1745
        %v2006 = vadd.f32 %v2005, %v1746
        %v2007 = vadd.f32 %v2006, %v1747
        %v2008 = vadd.f32 %v2007, %v1748
        %v2009 = vadd.f32 %v2008, %v1749
        %v2010 = vadd.f32 %v2009, %v1750
        %v2011 = vadd.f32 %v2010, %v1751
        %v2012 = vadd.f32 %v2011, %v1752
        %v2013 = vadd.f32 %v2012, %v1753
        %v2014 = vrot.slane %v2013, 4
        %v2015 = vadd.f32 %v2013, %v2014
        %v2016 = vrot.slane %v2015, 2
        %v2017 = vadd.f32 %v2015, %v2016
        %v2018 = vrot.slane %v2017, 1
        %v2019 = vadd.f32 %v2017, %v2018
        %v2020 = vadd.f32 %v1754, %v1755
        %v2021 = vadd.f32 %v2020, %v1756
        %v2022 = vadd.f32 %v2021, %v1757
        %v2023 = vadd.f32 %v2022, %v1758
        %v2024 = vadd.f32 %v2023, %v1759
        %v2025 = vadd.f32 %v2024, %v1760
        %v2026 = vadd.f32 %v2025, %v1761
        %v2027 = vadd.f32 %v2026, %v1762
        %v2028 = vadd.f32 %v2027, %v1763
        %v2029 = vadd.f32 %v2028, %v1764
        %v2030 = vadd.f32 %v2029, %v1765
        %v2031 = vadd.f32 %v2030, %v1766
        %v2032 = vadd.f32 %v2031, %v1767
        %v2033 = vadd.f32 %v2032, %v1768
        %v2034 = vadd.f32 %v2033, %v1769
        %v2035 = vadd.f32 %v2034, %v1770
        %v2036 = vadd.f32 %v2035, %v1771
        %v2037 = vadd.f32 %v2036, %v1772
        %v2038 = vadd.f32 %v2037, %v1773
        %v2039 = vadd.f32 %v2038, %v1774
        %v2040 = vadd.f32 %v2039, %v1775
        %v2041 = vadd.f32 %v2040, %v1776
        %v2042 = vadd.f32 %v2041, %v1777
        %v2043 = vadd.f32 %v2042, %v1778
        %v2044 = vadd.f32 %v2043, %v1779
        %v2045 = vadd.f32 %v2044, %v1780
        %v2046 = vadd.f32 %v2045, %v1781
        %v2047 = vadd.f32 %v2046, %v1782
        %v2048 = vadd.f32 %v2047, %v1783
        %v2049 = vadd.f32 %v2048, %v1784
        %v2050 = vadd.f32 %v2049, %v1785
        %v2051 = vrot.slane %v2050, 4
        %v2052 = vadd.f32 %v2050, %v2051
        %v2053 = vrot.slane %v2052, 2
        %v2054 = vadd.f32 %v2052, %v2053
        %v2055 = vrot.slane %v2054, 1
        %v2056 = vadd.f32 %v2054, %v2055
        %v2057 = vadd.f32 %v1786, %v1787
        %v2058 = vadd.f32 %v2057, %v1788
        %v2059 = vadd.f32 %v2058, %v1789
        %v2060 = vadd.f32 %v2059, %v1790
        %v2061 = vadd.f32 %v2060, %v1791
        %v2062 = vadd.f32 %v2061, %v1792
        %v2063 = vadd.f32 %v2062, %v1793
        %v2064 = vadd.f32 %v2063, %v1794
        %v2065 = vadd.f32 %v2064, %v1795
        %v2066 = vadd.f32 %v2065, %v1796
        %v2067 = vadd.f32 %v2066, %v1797
        %v2068 = vadd.f32 %v2067, %v1798
        %v2069 = vadd.f32 %v2068, %v1799
        %v2070 = vadd.f32 %v2069, %v1800
        %v2071 = vadd.f32 %v2070, %v1801
        %v2072 = vadd.f32 %v2071, %v1802
        %v2073 = vadd.f32 %v2072, %v1803
        %v2074 = vadd.f32 %v2073, %v1804
        %v2075 = vadd.f32 %v2074, %v1805
        %v2076 = vadd.f32 %v2075, %v1806
        %v2077 = vadd.f32 %v2076, %v1807
        %v2078 = vadd.f32 %v2077, %v1808
        %v2079 = vadd.f32 %v2078, %v1809
        %v2080 = vadd.f32 %v2079, %v1810
        %v2081 = vadd.f32 %v2080, %v1811
        %v2082 = vadd.f32 %v2081, %v1812
        %v2083 = vadd.f32 %v2082, %v1813
        %v2084 = vadd.f32 %v2083, %v1814
        %v2085 = vadd.f32 %v2084, %v1815
        %v2086 = vadd.f32 %v2085, %v1816
        %v2087 = vadd.f32 %v2086, %v1817
        %v2088 = vrot.slane %v2087, 4
        %v2089 = vadd.f32 %v2087, %v2088
        %v2090 = vrot.slane %v2089, 2
        %v2091 = vadd.f32 %v2089, %v2090
        %v2092 = vrot.slane %v2091, 1
        %v2093 = vadd.f32 %v2091, %v2092
        %v2094 = vadd.f32 %v1818, %v1819
        %v2095 = vadd.f32 %v2094, %v1820
        %v2096 = vadd.f32 %v2095, %v1821
        %v2097 = vadd.f32 %v2096, %v1822
        %v2098 = vadd.f32 %v2097, %v1823
        %v2099 = vadd.f32 %v2098, %v1824
        %v2100 = vadd.f32 %v2099, %v1825
        %v2101 = vadd.f32 %v2100, %v1826
        %v2102 = vadd.f32 %v2101, %v1827
        %v2103 = vadd.f32 %v2102, %v1828
        %v2104 = vadd.f32 %v2103, %v1829
        %v2105 = vadd.f32 %v2104, %v1830
        %v2106 = vadd.f32 %v2105, %v1831
        %v2107 = vadd.f32 %v2106, %v1832
        %v2108 = vadd.f32 %v2107, %v1833
        %v2109 = vadd.f32 %v2108, %v1834
        %v2110 = vadd.f32 %v2109, %v1835
        %v2111 = vadd.f32 %v2110, %v1836
        %v2112 = vadd.f32 %v2111, %v1837
        %v2113 = vadd.f32 %v2112, %v1838
        %v2114 = vadd.f32 %v2113, %v1839
        %v2115 = vadd.f32 %v2114, %v1840
        %v2116 = vadd.f32 %v2115, %v1841
        %v2117 = vadd.f32 %v2116, %v1842
        %v2118 = vadd.f32 %v2117, %v1843
        %v2119 = vadd.f32 %v2118, %v1844
        %v2120 = vadd.f32 %v2119, %v1845
        %v2121 = vadd.f32 %v2120, %v1846
        %v2122 = vadd.f32 %v2121, %v1847
        %v2123 = vadd.f32 %v2122, %v1848
        %v2124 = vadd.f32 %v2123, %v1849
        %v2125 = vrot.slane %v2124, 4
        %v2126 = vadd.f32 %v2124, %v2125
        %v2127 = vrot.slane %v2126, 2
        %v2128 = vadd.f32 %v2126, %v2127
        %v2129 = vrot.slane %v2128, 1
        %v2130 = vadd.f32 %v2128, %v2129
        %v2131 = vadd.f32 %v1850, %v1851
        %v2132 = vadd.f32 %v2131, %v1852
        %v2133 = vadd.f32 %v2132, %v1853
        %v2134 = vadd.f32 %v2133, %v1854
        %v2135 = vadd.f32 %v2134, %v1855
        %v2136 = vadd.f32 %v2135, %v1856
        %v2137 = vadd.f32 %v2136, %v1857
        %v2138 = vadd.f32 %v2137, %v1858
        %v2139 = vadd.f32 %v2138, %v1859
        %v2140 = vadd.f32 %v2139, %v1860
        %v2141 = vadd.f32 %v2140, %v1861
        %v2142 = vadd.f32 %v2141, %v1862
        %v2143 = vadd.f32 %v2142, %v1863
        %v2144 = vadd.f32 %v2143, %v1864
        %v2145 = vadd.f32 %v2144, %v1865
        %v2146 = vadd.f32 %v2145, %v1866
        %v2147 = vadd.f32 %v2146, %v1867
        %v2148 = vadd.f32 %v2147, %v1868
        %v2149 = vadd.f32 %v2148, %v1869
        %v2150 = vadd.f32 %v2149, %v1870
        %v2151 = vadd.f32 %v2150, %v1871
        %v2152 = vadd.f32 %v2151, %v1872
        %v2153 = vadd.f32 %v2152, %v1873
        %v2154 = vadd.f32 %v2153, %v1874
        %v2155 = vadd.f32 %v2154, %v1875
        %v2156 = vadd.f32 %v2155, %v1876
        %v2157 = vadd.f32 %v2156, %v1877
        %v2158 = vadd.f32 %v2157, %v1878
        %v2159 = vadd.f32 %v2158, %v1879
        %v2160 = vadd.f32 %v2159, %v1880
        %v2161 = vadd.f32 %v2160, %v1881
        %v2162 = vrot.slane %v2161, 4
        %v2163 = vadd.f32 %v2161, %v2162
        %v2164 = vrot.slane %v2163, 2
        %v2165 = vadd.f32 %v2163, %v2164
        %v2166 = vrot.slane %v2165, 1
        %v2167 = vadd.f32 %v2165, %v2166
        %v2168 = vadd.f32 %v1882, %v1883
        %v2169 = vadd.f32 %v2168, %v1884
        %v2170 = vadd.f32 %v2169, %v1885
        %v2171 = vadd.f32 %v2170, %v1886
        %v2172 = vadd.f32 %v2171, %v1887
        %v2173 = vadd.f32 %v2172, %v1888
        %v2174 = vadd.f32 %v2173, %v1889
        %v2175 = vadd.f32 %v2174, %v1890
        %v2176 = vadd.f32 %v2175, %v1891
        %v2177 = vadd.f32 %v2176, %v1892
        %v2178 = vadd.f32 %v2177, %v1893
        %v2179 = vadd.f32 %v2178, %v1894
        %v2180 = vadd.f32 %v2179, %v1895
        %v2181 = vadd.f32 %v2180, %v1896
        %v2182 = vadd.f32 %v2181, %v1897
        %v2183 = vadd.f32 %v2182, %v1898
        %v2184 = vadd.f32 %v2183, %v1899
        %v2185 = vadd.f32 %v2184, %v1900
        %v2186 = vadd.f32 %v2185, %v1901
        %v2187 = vadd.f32 %v2186, %v1902
        %v2188 = vadd.f32 %v2187, %v1903
        %v2189 = vadd.f32 %v2188, %v1904
        %v2190 = vadd.f32 %v2189, %v1905
        %v2191 = vadd.f32 %v2190, %v1906
        %v2192 = vadd.f32 %v2191, %v1907
        %v2193 = vadd.f32 %v2192, %v1908
        %v2194 = vadd.f32 %v2193, %v1909
        %v2195 = vadd.f32 %v2194, %v1910
        %v2196 = vadd.f32 %v2195, %v1911
        %v2197 = vadd.f32 %v2196, %v1912
        %v2198 = vadd.f32 %v2197, %v1913
        %v2199 = vrot.slane %v2198, 4
        %v2200 = vadd.f32 %v2198, %v2199
        %v2201 = vrot.slane %v2200, 2
        %v2202 = vadd.f32 %v2200, %v2201
        %v2203 = vrot.slane %v2202, 1
        %v2204 = vadd.f32 %v2202, %v2203
        %v2205 = vadd.f32 %v1914, %v1915
        %v2206 = vadd.f32 %v2205, %v1916
        %v2207 = vadd.f32 %v2206, %v1917
        %v2208 = vadd.f32 %v2207, %v1918
        %v2209 = vadd.f32 %v2208, %v1919
        %v2210 = vadd.f32 %v2209, %v1920
        %v2211 = vadd.f32 %v2210, %v1921
        %v2212 = vadd.f32 %v2211, %v1922
        %v2213 = vadd.f32 %v2212, %v1923
        %v2214 = vadd.f32 %v2213, %v1924
        %v2215 = vadd.f32 %v2214, %v1925
        %v2216 = vadd.f32 %v2215, %v1926
        %v2217 = vadd.f32 %v2216, %v1927
        %v2218 = vadd.f32 %v2217, %v1928
        %v2219 = vadd.f32 %v2218, %v1929
        %v2220 = vadd.f32 %v2219, %v1930
        %v2221 = vadd.f32 %v2220, %v1931
        %v2222 = vadd.f32 %v2221, %v1932
        %v2223 = vadd.f32 %v2222, %v1933
        %v2224 = vadd.f32 %v2223, %v1934
        %v2225 = vadd.f32 %v2224, %v1935
        %v2226 = vadd.f32 %v2225, %v1936
        %v2227 = vadd.f32 %v2226, %v1937
        %v2228 = vadd.f32 %v2227, %v1938
        %v2229 = vadd.f32 %v2228, %v1939
        %v2230 = vadd.f32 %v2229, %v1940
        %v2231 = vadd.f32 %v2230, %v1941
        %v2232 = vadd.f32 %v2231, %v1942
        %v2233 = vadd.f32 %v2232, %v1943
        %v2234 = vadd.f32 %v2233, %v1944
        %v2235 = vadd.f32 %v2234, %v1945
        %v2236 = vrot.slane %v2235, 4
        %v2237 = vadd.f32 %v2235, %v2236
        %v2238 = vrot.slane %v2237, 2
        %v2239 = vadd.f32 %v2237, %v2238
        %v2240 = vrot.slane %v2239, 1
        %v2241 = vadd.f32 %v2239, %v2240
        %vm2250 = vcmask 1041409
        %v2251 = vsel %vm2250, %v2019, %v1982
        %vm2252 = vcmask 1042434
        %v2253 = vsel %vm2252, %v2056, %v2251
        %vm2254 = vcmask 1043459
        %v2255 = vsel %vm2254, %v2093, %v2253
        %vm2256 = vcmask 1044484
        %v2257 = vsel %vm2256, %v2130, %v2255
        %vm2258 = vcmask 1045509
        %v2259 = vsel %vm2258, %v2167, %v2257
        %vm2260 = vcmask 1046534
        %v2261 = vsel %vm2260, %v2204, %v2259
        %vm2262 = vcmask 1047559
        %v2263 = vsel %vm2262, %v2241, %v2261
        %v2265 = vadd.f32 %v617, %v2263
        %2266 = vst [vmem:[#allocation2] sm:$0xff] %v2265
        %v2267 = vld [vmem:[#allocation3] sm:$0xff]
        %v2268 = vadd.f32 %v615, %v616
        %2269 = vadd.xlane.f32.xlu0 %v2268
        %v2270 = vpop.xlane.xlu0 %2269
        %v2271 = vadd.f32 %v2267, %v2270
        %vm2272 = vcmask 7168
        %2273 = vst.msk [vmem:[#allocation3] sm:$0xff] %vm2272, %v2271
        // Predicated region
        $region61: #{sentence_classification_forward.1} parent=43 // pred_check
          %p2274 = pneg %p352
        $region62: #{sentence_classification_forward.1} parent=43 // pred_check_branch
          %2276 = sbr.rel (%p2274) target = $region64
        $region63: #{sentence_classification_forward.1} parent=43 // pred_region
          %v2277 = vld [vmem:[#allocation3] sm:$0xff]
          %v2278 = vmax.f32 %v2277, 1.0
          %v2279 = vld [vmem:[#allocation2] sm:$0xff]
          %2281 = vset.pattern.permute.xlu0 0
          %2282 = vperm.xlu0 %2281, %v2278
          %v2283 = vpop.permute.xlu0 %2282
          %v2285 = vrcp.pop %v2283
          %v2286 = vmul.f32 %v2279, %v2285
          %v2287 = vld [vmem:[#allocation6] sm:$0xff]
          %v2288 = vld [vmem:[#allocation6 + $0x8] sm:$0xff]
          %v2289 = vld [vmem:[#allocation6 + $0x10] sm:$0xff]
          %v2290 = vld [vmem:[#allocation6 + $0x18] sm:$0xff]
          %v2291 = vld [vmem:[#allocation6 + $0x20] sm:$0xff]
          %v2292 = vld [vmem:[#allocation6 + $0x28] sm:$0xff]
          %v2293 = vld [vmem:[#allocation6 + $0x30] sm:$0xff]
          %v2294 = vld [vmem:[#allocation6 + $0x38] sm:$0xff]
          %v2295 = vld [vmem:[#allocation6 + $0x40] sm:$0xff]
          %v2296 = vld [vmem:[#allocation6 + $0x48] sm:$0xff]
          %v2297 = vld [vmem:[#allocation6 + $0x50] sm:$0xff]
          %v2298 = vld [vmem:[#allocation6 + $0x58] sm:$0xff]
          %v2299 = vld [vmem:[#allocation6 + $0x60] sm:$0xff]
          %v2300 = vld [vmem:[#allocation6 + $0x68] sm:$0xff]
          %v2301 = vld [vmem:[#allocation6 + $0x70] sm:$0xff]
          %v2302 = vld [vmem:[#allocation6 + $0x78] sm:$0xff]
          %v2303 = vld [vmem:[#allocation8] sm:$0x1]
          %v2305 = vlaneseq
          %v2306 = vshrl.u32 %v2305, 7
          %v2307 = vsub.s32 0, %v2306
          %v2308 = vrot.slane %v2303, %v2307
          %2310 = vmatprep.subr.mxu0 0.0
          %2311 = vmatpush1.msra.mxu0 %v2302
          %2312 = vmatprep.subr.mxu0 0.0
          %2313 = vmatpush1.msra.mxu0 %v2301
          %2314 = vmatprep.subr.mxu0 0.0
          %2315 = vmatpush1.msra.mxu0 %v2300
          %2316 = vmatprep.subr.mxu0 0.0
          %2317 = vmatpush1.msra.mxu0 %v2299
          %2318 = vmatprep.subr.mxu0 0.0
          %2319 = vmatpush1.msra.mxu0 %v2298
          %2320 = vmatprep.subr.mxu0 0.0
          %2321 = vmatpush1.msra.mxu0 %v2297
          %2322 = vmatprep.subr.mxu0 0.0
          %2323 = vmatpush1.msra.mxu0 %v2296
          %2324 = vmatprep.subr.mxu0 0.0
          %2325 = vmatpush1.msra.mxu0 %v2295
          %2326 = vmatprep.subr.mxu0 0.0
          %2327 = vmatpush1.msra.mxu0 %v2294
          %2328 = vmatprep.subr.mxu0 0.0
          %2329 = vmatpush1.msra.mxu0 %v2293
          %2330 = vmatprep.subr.mxu0 0.0
          %2331 = vmatpush1.msra.mxu0 %v2292
          %2332 = vmatprep.subr.mxu0 0.0
          %2333 = vmatpush1.msra.mxu0 %v2291
          %2334 = vmatprep.subr.mxu0 0.0
          %2335 = vmatpush1.msra.mxu0 %v2290
          %2336 = vmatprep.subr.mxu0 0.0
          %2337 = vmatpush1.msra.mxu0 %v2289
          %2338 = vmatprep.subr.mxu0 0.0
          %2339 = vmatpush1.msra.mxu0 %v2288
          %2340 = vmatprep.subr.mxu0 0.0
          %2341 = vmatpush1.msra.mxu0 %v2287
          %2342 = vmatprep.subr.mxu0 0.0
          %2343 = vmatpush2.msra.mxu0 0.0
          %2344 = vmatprep.subr.mxu0 0.0
          %2345 = vmatpush2.msra.mxu0 0.0
          %2346 = vmatprep.subr.mxu0 0.0
          %2347 = vmatpush2.msra.mxu0 0.0
          %2348 = vmatprep.subr.mxu0 0.0
          %2349 = vmatpush2.msra.mxu0 0.0
          %2350 = vmatprep.subr.mxu0 0.0
          %2351 = vmatpush2.msra.mxu0 0.0
          %2352 = vmatprep.subr.mxu0 0.0
          %2353 = vmatpush2.msra.mxu0 0.0
          %2354 = vmatprep.subr.mxu0 0.0
          %2355 = vmatpush2.msra.mxu0 0.0
          %2356 = vmatprep.subr.mxu0 0.0
          %2357 = vmatpush2.msra.mxu0 0.0
          %2358 = vmatprep.subr.mxu0 0.0
          %2359 = vmatpush2.msra.mxu0 0.0
          %2360 = vmatprep.subr.mxu0 0.0
          %2361 = vmatpush2.msra.mxu0 0.0
          %2362 = vmatprep.subr.mxu0 0.0
          %2363 = vmatpush2.msra.mxu0 0.0
          %2364 = vmatprep.subr.mxu0 0.0
          %2365 = vmatpush2.msra.mxu0 0.0
          %2366 = vmatprep.subr.mxu0 0.0
          %2367 = vmatpush2.msra.mxu0 0.0
          %2368 = vmatprep.subr.mxu0 0.0
          %2369 = vmatpush2.msra.mxu0 0.0
          %2370 = vmatprep.subr.mxu0 0.0
          %2371 = vmatpush2.msra.mxu0 0.0
          %2372 = vmatprep.subr.mxu0 0.0
          %2373 = vmatpush2.msra.mxu0 0.0
          %2374 = vmatprep.mubr.f32.mxu0 0.0
          %2375 = vmatmul.mubr.f32.gmra.mxu0 %v2286
          %v2376 = vpop.f32.mrf.mxu0
          %v2377 = vadd.f32 %v2308, %v2376
          %v2378 = vpop.f32.mrf.mxu0
          %2379 = vdwg.mxu0
          %v2380 = vtanh.pop %v2377
          %v2381 = vld [vmem:[%s4] sm:$0xff]
          %v2382 = vld [vmem:[%s4 + $0x8] sm:$0xff]
          %v2383 = vld [vmem:[%s4 + $0x10] sm:$0xff]
          %v2384 = vld [vmem:[%s4 + $0x18] sm:$0xff]
          %v2385 = vld [vmem:[%s4 + $0x20] sm:$0xff]
          %v2386 = vld [vmem:[%s4 + $0x28] sm:$0xff]
          %v2387 = vld [vmem:[%s4 + $0x30] sm:$0xff]
          %v2388 = vld [vmem:[%s4 + $0x38] sm:$0xff]
          %v2389 = vld [vmem:[%s4 + $0x40] sm:$0xff]
          %v2390 = vld [vmem:[%s4 + $0x48] sm:$0xff]
          %v2391 = vld [vmem:[%s4 + $0x50] sm:$0xff]
          %v2392 = vld [vmem:[%s4 + $0x58] sm:$0xff]
          %v2393 = vld [vmem:[%s4 + $0x60] sm:$0xff]
          %v2394 = vld [vmem:[%s4 + $0x68] sm:$0xff]
          %v2395 = vld [vmem:[%s4 + $0x70] sm:$0xff]
          %v2396 = vld [vmem:[%s4 + $0x78] sm:$0xff]
          %v2397 = vld [vmem:[%s5] sm:$0x1]
          %v2399 = vlaneseq
          %v2400 = vshrl.u32 %v2399, 7
          %v2401 = vsub.s32 0, %v2400
          %v2402 = vrot.slane %v2397, %v2401
          %2404 = vmatprep.subr.mxu0 0.0
          %2405 = vmatpush1.msra.mxu0 %v2396
          %2406 = vmatprep.subr.mxu0 0.0
          %2407 = vmatpush1.msra.mxu0 %v2395
          %2408 = vmatprep.subr.mxu0 0.0
          %2409 = vmatpush1.msra.mxu0 %v2394
          %2410 = vmatprep.subr.mxu0 0.0
          %2411 = vmatpush1.msra.mxu0 %v2393
          %2412 = vmatprep.subr.mxu0 0.0
          %2413 = vmatpush1.msra.mxu0 %v2392
          %2414 = vmatprep.subr.mxu0 0.0
          %2415 = vmatpush1.msra.mxu0 %v2391
          %2416 = vmatprep.subr.mxu0 0.0
          %2417 = vmatpush1.msra.mxu0 %v2390
          %2418 = vmatprep.subr.mxu0 0.0
          %2419 = vmatpush1.msra.mxu0 %v2389
          %2420 = vmatprep.subr.mxu0 0.0
          %2421 = vmatpush1.msra.mxu0 %v2388
          %2422 = vmatprep.subr.mxu0 0.0
          %2423 = vmatpush1.msra.mxu0 %v2387
          %2424 = vmatprep.subr.mxu0 0.0
          %2425 = vmatpush1.msra.mxu0 %v2386
          %2426 = vmatprep.subr.mxu0 0.0
          %2427 = vmatpush1.msra.mxu0 %v2385
          %2428 = vmatprep.subr.mxu0 0.0
          %2429 = vmatpush1.msra.mxu0 %v2384
          %2430 = vmatprep.subr.mxu0 0.0
          %2431 = vmatpush1.msra.mxu0 %v2383
          %2432 = vmatprep.subr.mxu0 0.0
          %2433 = vmatpush1.msra.mxu0 %v2382
          %2434 = vmatprep.subr.mxu0 0.0
          %2435 = vmatpush1.msra.mxu0 %v2381
          %2436 = vmatprep.subr.mxu0 0.0
          %2437 = vmatpush2.msra.mxu0 0.0
          %2438 = vmatprep.subr.mxu0 0.0
          %2439 = vmatpush2.msra.mxu0 0.0
          %2440 = vmatprep.subr.mxu0 0.0
          %2441 = vmatpush2.msra.mxu0 0.0
          %2442 = vmatprep.subr.mxu0 0.0
          %2443 = vmatpush2.msra.mxu0 0.0
          %2444 = vmatprep.subr.mxu0 0.0
          %2445 = vmatpush2.msra.mxu0 0.0
          %2446 = vmatprep.subr.mxu0 0.0
          %2447 = vmatpush2.msra.mxu0 0.0
          %2448 = vmatprep.subr.mxu0 0.0
          %2449 = vmatpush2.msra.mxu0 0.0
          %2450 = vmatprep.subr.mxu0 0.0
          %2451 = vmatpush2.msra.mxu0 0.0
          %2452 = vmatprep.subr.mxu0 0.0
          %2453 = vmatpush2.msra.mxu0 0.0
          %2454 = vmatprep.subr.mxu0 0.0
          %2455 = vmatpush2.msra.mxu0 0.0
          %2456 = vmatprep.subr.mxu0 0.0
          %2457 = vmatpush2.msra.mxu0 0.0
          %2458 = vmatprep.subr.mxu0 0.0
          %2459 = vmatpush2.msra.mxu0 0.0
          %2460 = vmatprep.subr.mxu0 0.0
          %2461 = vmatpush2.msra.mxu0 0.0
          %2462 = vmatprep.subr.mxu0 0.0
          %2463 = vmatpush2.msra.mxu0 0.0
          %2464 = vmatprep.subr.mxu0 0.0
          %2465 = vmatpush2.msra.mxu0 0.0
          %2466 = vmatprep.subr.mxu0 0.0
          %2467 = vmatpush2.msra.mxu0 0.0
          %2468 = vmatprep.mubr.f32.mxu0 0.0
          %2469 = vmatmul.mubr.f32.gmra.mxu0 %v2380
          %v2470 = vpop.f32.mrf.mxu0
          %v2471 = vadd.f32 %v2402, %v2470
          %v2472 = vpop.f32.mrf.mxu0
          %2473 = vdwg.mxu0
          %2474 = vst [vmem:[%s351] sm:$0xff] %v2471
        $region64: #{sentence_classification_forward.1} parent=43 // pred_fallthru
          _
        %p2475 = scmp.lt.s32.totalorder %s25, 1
        %s2476 = scalar_select %p2475, %s25, 1
        %s2477 = smul.addr %s2476, 8
        %s2478 = scalar_lea.vmem %s6, %s2477
        // Predicated region
        $region65: #{sentence_classification_forward.1} parent=43 // pred_check
          %p2479 = pneg %p191
        $region66: #{sentence_classification_forward.1} parent=43 // pred_check_branch
          %2481 = sbr.rel (%p2479) target = $region68
        $region67: #{sentence_classification_forward.1} parent=43 // pred_region
          _
        $region68: #{sentence_classification_forward.1} parent=43 // pred_fallthru
          _
      $region44: #{sentence_classification_forward.1} parent=5 // pred_fallthru
        _
      %p2482 = scmp.le.s32.totalorder 2, %s16
      // Predicated region
      $region69: #{sentence_classification_forward.1} parent=5 // pred_check
        %p2483 = pneg %p2482
      $region70: #{sentence_classification_forward.1} parent=5 // pred_check_branch
        %2485 = sbr.rel (%p2483) target = $region72
      $region71: #{sentence_classification_forward.1} parent=5 // pred_region
        %s2486 = ssub.s32 %s16, 2
        // Predicated region
        $region73: #{sentence_classification_forward.1} parent=71 // pred_check
          %p2487 = pneg %p197
        $region74: #{sentence_classification_forward.1} parent=71 // pred_check_branch
          %2489 = sbr.rel (%p2487) target = $region76
        $region75: #{sentence_classification_forward.1} parent=71 // pred_region
          %p2490 = scmp.lt.s32.totalorder %s27, 1
          %s2491 = scalar_select %p2490, %s27, 1
          %s2492 = smul.addr %s2491, 8
          %s2493 = scalar_lea.vmem %s6, %s2492
        $region76: #{sentence_classification_forward.1} parent=71 // pred_fallthru
          _
      $region72: #{sentence_classification_forward.1} parent=5 // pred_fallthru
        _
    $region6: #{sentence_classification_forward.1} parent=1 // loop_footer
      %s20 = sadd.s32 1, %s16
    $region7: #{sentence_classification_forward.1} parent=1 // loop_footer_branch
      %15 = sbr.rel target = $region3
    $region8: #{sentence_classification_forward.1} parent=1 // loop_exit
      _
    %2494 = vsyncpa [#allocation5], 1
    %s2495 = scalar_lea.sflag [#allocation5], 1
    %2496 = vsyncpa %s2495, 1
    %2497 = vsyncpa [#allocation7], 1

</llo_original>
